<compile_context>
chip_gen: v7x
topology: tpu7x:2x2x1
jax: 0.10.0
libtpu: 0.0.40
codegen_flags: <defaults>
</compile_context>

<pallas_src>
import functools

import jax
import jax.numpy as jnp
from jax import lax
from jax.experimental import pallas as pl
from jax.experimental.pallas import tpu as pltpu


# ----------------------------- Pallas kernel ------------------------------- #

def _convblock_kernel(x_ref, w_ref, m_ref, o_ref, *, k, pad, wp, lp, ext, inv_hw):
    # x_ref: (1, Cin, Lext)   reflect-padded sample, flattened over (Hp*Wp) and
    #                         zero-extended by `ext` on both ends of the flat axis.
    # w_ref: (K*K, Cout, Cin) conv weight, one (Cout, Cin) matrix per spatial tap.
    # m_ref: (1, Lp)          1.0 at valid (non-pad) spatial positions, else 0.0.
    # o_ref: (1, Cout, Lp)    normalized + ReLU output over the padded flat domain.
    y = None
    for t in range(k * k):                       # static, unrolled: K*K = 9 taps
        kh, kw = divmod(t, k)
        # Tap (kh, kw) is a constant lane shift in the padded flat domain.
        start = ext + (kh - pad) * wp + (kw - pad)
        x_tap = x_ref[0, :, start:start + lp]    # (Cin, Lp), static lane slice
        c = jnp.dot(w_ref[t], x_tap, preferred_element_type=jnp.float32)
        y = c if y is None else y + c            # (Cout, Lp) f32 accumulator

    # InstanceNorm2d (affine=False, eps=1e-5): per-channel stats over the HW=256
    # valid spatial positions only (pad ring is masked out of the statistics).
    mask = m_ref[...]                                            # (1, Lp)
    mean = jnp.sum(y * mask, axis=-1, keepdims=True) * inv_hw    # (Cout, 1)
    d = (y - mean) * mask
    var = jnp.sum(d * d, axis=-1, keepdims=True) * inv_hw        # biased variance
    y = (y - mean) * lax.rsqrt(var + 1e-5)

    # ReLU; lane-dense store (last dim = Lp = 324).
    o_ref[0] = jnp.maximum(y, 0.0).astype(o_ref.dtype)


# ------------------------------ JAX wrapper -------------------------------- #

@functools.partial(jax.jit, static_argnames=("kernel_size",))
def conv_block_forward(x, weight, bias=None, kernel_size=3):
    """ConvBlock forward.

    x:      (N, Cin, H, W) float32, NCHW
    weight: (Cout, Cin, K, K)
    bias:   (Cout,)  -- accepted for API parity, mathematically cancelled by
                         InstanceNorm(affine=False), so not used.
    returns (N, Cout, H, W)
    """
    del bias  # InstanceNorm subtracts the per-channel mean -> bias is a no-op.

    n, cin, h, w = x.shape
    cout = weight.shape[0]
    k = kernel_size
    pad = k // 2
    hp, wp = h + 2 * pad, w + 2 * pad
    lp = hp * wp                       # padded flat spatial length (324)
    ext = pad * (wp + 1)               # max |tap shift| in the flat domain (19)
    lext = lp + 2 * ext                # zero-extended flat length (362)

    # Reflect pad (matches nn.Conv2d padding_mode='reflect'), flatten spatial,
    # zero-extend so every tap slice stays in bounds. Only ~1.4x of x through
    # HBM (vs 9x for im2col).
    xp = jnp.pad(x, ((0, 0), (0, 0), (pad, pad), (pad, pad)), mode="reflect")
    xpf = xp.reshape(n, cin, lp)
    xpe = jnp.pad(xpf, ((0, 0), (0, 0), (ext, ext)))             # (N, Cin, Lext)

    # Weight per tap: (K*K, Cout, Cin), tap index t = kh*K + kw.
    w_taps = jnp.transpose(weight, (2, 3, 0, 1)).reshape(k * k, cout, cin)

    # Validity mask over the padded flat domain (excludes the reflect-pad ring).
    row_valid = (jnp.arange(hp) >= pad) & (jnp.arange(hp) < pad + h)
    col_valid = (jnp.arange(wp) >= pad) & (jnp.arange(wp) < pad + w)
    mask = (row_valid[:, None] & col_valid[None, :]).astype(jnp.float32)
    mask = mask.reshape(1, lp)                                   # (1, Lp)

    kern = functools.partial(
        _convblock_kernel, k=k, pad=pad, wp=wp, lp=lp, ext=ext,
        inv_hw=1.0 / float(h * w))

    out_pad = pl.pallas_call(
        kern,
        out_shape=jax.ShapeDtypeStruct((n, cout, lp), jnp.float32),
        grid_spec=pltpu.PrefetchScalarGridSpec(
            num_scalar_prefetch=0,
            grid=(n,),
            in_specs=[
                pl.BlockSpec((1, cin, lext), lambda i: (i, 0, 0)),
                pl.BlockSpec((k * k, cout, cin), lambda i: (0, 0, 0)),
                pl.BlockSpec((1, lp), lambda i: (0, 0)),
            ],
            out_specs=pl.BlockSpec((1, cout, lp), lambda i: (i, 0, 0)),
        ),
        compiler_params=pltpu.CompilerParams(
            dimension_semantics=("parallel",)),   # both TCs busy on v7x
    )(xpe, w_taps, mask)

    # (N, Cout, Lp) -> (N, Cout, Hp, Wp) is a free reshape; drop the pad ring.
    out = out_pad.reshape(n, cout, hp, wp)[:, :, pad:pad + h, pad:pad + w]
    return out


# ------------------------------ reference ---------------------------------- #

def _reference(x, weight, bias, k=3):
    pad = k // 2
    xp = jnp.pad(x, ((0, 0), (0, 0), (pad, pad), (pad, pad)), mode="reflect")
    y = lax.conv_general_dilated(
        xp, weight, window_strides=(1, 1), padding="VALID",
        dimension_numbers=("NCHW", "OIHW", "NCHW"))
    y = y + bias.reshape(1, -1, 1, 1)
    mean = jnp.mean(y, axis=(2, 3), keepdims=True)
    var = jnp.mean((y - mean) ** 2, axis=(2, 3), keepdims=True)
    y = (y - mean) / jnp.sqrt(var + 1e-5)
    return jnp.maximum(y, 0.0)


# --------------------------------- main ------------------------------------ #

if __name__ == "__main__":
    # ConvBlock(in_channels=4, out_channels=8, down=True, use_act=True,
    #           kernel_size=3, stride=1, padding=1)
    N, CIN, COUT, H, W, K = 2, 4, 8, 16, 16, 3

    key = jax.random.PRNGKey(0)
    kx, kw_, kb = jax.random.split(key, 3)
    x = jax.random.normal(kx, (N, CIN, H, W), dtype=jnp.float32)
    fan_in = CIN * K * K
    bound = 1.0 / (fan_in ** 0.5)
    weight = jax.random.uniform(kw_, (COUT, CIN, K, K), jnp.float32, -bound, bound)
    bias = jax.random.uniform(kb, (COUT,), jnp.float32, -bound, bound)

    out = conv_block_forward(x, weight, bias, kernel_size=K)
    out = jax.block_until_ready(out)

    ref = _reference(x, weight, bias, K)
    assert out.shape == (N, COUT, H, W)
    assert jnp.allclose(out, ref, atol=1e-4, rtol=1e-4), "mismatch vs reference"

    print("KERNEL_OK")
</pallas_src>

<mosaic_0001>
module attributes {stable_mosaic.version = 11 : i64} {
  func.func @_convblock_kernel(%arg0: i32, %arg1: memref<1x4x362xf32, #tpu.memory_space<vmem>>, %arg2: memref<9x8x4xf32, #tpu.memory_space<vmem>>, %arg3: memref<1x324xf32, #tpu.memory_space<vmem>>, %arg4: memref<1x8x324xf32, #tpu.memory_space<vmem>>) attributes {dimension_semantics = [#tpu.dimension_semantics<parallel>], iteration_bounds = array<i64: 2>, scalar_prefetch = 0 : i64, scratch_operands = 0 : i64, tpu.core_type = #tpu.core_type<tc>, window_params = [{transform_indices = @transform_0, window_bounds = array<i64: 1, 4, 362>}, {pipeline_mode = #tpu.pipeline_mode<synchronous>, transform_indices = @transform_1, window_bounds = array<i64: 9, 8, 4>}, {pipeline_mode = #tpu.pipeline_mode<synchronous>, transform_indices = @transform_2, window_bounds = array<i64: 1, 324>}, {transform_indices = @transform_3, window_bounds = array<i64: 1, 8, 324>}]} {
    %c0 = arith.constant 0 : index
    %c0_0 = arith.constant 0 : index
    %c0_1 = arith.constant 0 : index
    %0 = vector.load %arg1[%c0, %c0_0, %c0_1] : memref<1x4x362xf32, #tpu.memory_space<vmem>>, vector<1x4x324xf32>
    %1 = vector.shape_cast %0 : vector<1x4x324xf32> to vector<4x324xf32>
    %c0_2 = arith.constant 0 : index
    %c0_3 = arith.constant 0 : index
    %c0_4 = arith.constant 0 : index
    %2 = vector.load %arg2[%c0_2, %c0_3, %c0_4] : memref<9x8x4xf32, #tpu.memory_space<vmem>>, vector<1x8x4xf32>
    %3 = vector.shape_cast %2 : vector<1x8x4xf32> to vector<8x4xf32>
    %cst = arith.constant dense<0.000000e+00> : vector<8x324xf32>
    %4 = tpu.matmul %3, %1, %cst {dimension_numbers = #tpu.dot_dimension_numbers<[1], [0], [0], [1], [0, 0, 1, 1], [], []>} : vector<8x4xf32>, vector<4x324xf32>, vector<8x324xf32> -> vector<8x324xf32>
    %c0_5 = arith.constant 0 : index
    %c0_6 = arith.constant 0 : index
    %c1 = arith.constant 1 : index
    %5 = vector.load %arg1[%c0_5, %c0_6, %c1] : memref<1x4x362xf32, #tpu.memory_space<vmem>>, vector<1x4x324xf32>
    %6 = vector.shape_cast %5 : vector<1x4x324xf32> to vector<4x324xf32>
    %c1_7 = arith.constant 1 : index
    %c0_8 = arith.constant 0 : index
    %c0_9 = arith.constant 0 : index
    %7 = vector.load %arg2[%c1_7, %c0_8, %c0_9] : memref<9x8x4xf32, #tpu.memory_space<vmem>>, vector<1x8x4xf32>
    %8 = vector.shape_cast %7 : vector<1x8x4xf32> to vector<8x4xf32>
    %cst_10 = arith.constant dense<0.000000e+00> : vector<8x324xf32>
    %9 = tpu.matmul %8, %6, %cst_10 {dimension_numbers = #tpu.dot_dimension_numbers<[1], [0], [0], [1], [0, 0, 1, 1], [], []>} : vector<8x4xf32>, vector<4x324xf32>, vector<8x324xf32> -> vector<8x324xf32>
    %10 = arith.addf %4, %9 : vector<8x324xf32>
    %c0_11 = arith.constant 0 : index
    %c0_12 = arith.constant 0 : index
    %c2 = arith.constant 2 : index
    %11 = vector.load %arg1[%c0_11, %c0_12, %c2] : memref<1x4x362xf32, #tpu.memory_space<vmem>>, vector<1x4x324xf32>
    %12 = vector.shape_cast %11 : vector<1x4x324xf32> to vector<4x324xf32>
    %c2_13 = arith.constant 2 : index
    %c0_14 = arith.constant 0 : index
    %c0_15 = arith.constant 0 : index
    %13 = vector.load %arg2[%c2_13, %c0_14, %c0_15] : memref<9x8x4xf32, #tpu.memory_space<vmem>>, vector<1x8x4xf32>
    %14 = vector.shape_cast %13 : vector<1x8x4xf32> to vector<8x4xf32>
    %cst_16 = arith.constant dense<0.000000e+00> : vector<8x324xf32>
    %15 = tpu.matmul %14, %12, %cst_16 {dimension_numbers = #tpu.dot_dimension_numbers<[1], [0], [0], [1], [0, 0, 1, 1], [], []>} : vector<8x4xf32>, vector<4x324xf32>, vector<8x324xf32> -> vector<8x324xf32>
    %16 = arith.addf %10, %15 : vector<8x324xf32>
    %c0_17 = arith.constant 0 : index
    %c0_18 = arith.constant 0 : index
    %c18 = arith.constant 18 : index
    %17 = vector.load %arg1[%c0_17, %c0_18, %c18] : memref<1x4x362xf32, #tpu.memory_space<vmem>>, vector<1x4x324xf32>
    %18 = vector.shape_cast %17 : vector<1x4x324xf32> to vector<4x324xf32>
    %c3 = arith.constant 3 : index
    %c0_19 = arith.constant 0 : index
    %c0_20 = arith.constant 0 : index
    %19 = vector.load %arg2[%c3, %c0_19, %c0_20] : memref<9x8x4xf32, #tpu.memory_space<vmem>>, vector<1x8x4xf32>
    %20 = vector.shape_cast %19 : vector<1x8x4xf32> to vector<8x4xf32>
    %cst_21 = arith.constant dense<0.000000e+00> : vector<8x324xf32>
    %21 = tpu.matmul %20, %18, %cst_21 {dimension_numbers = #tpu.dot_dimension_numbers<[1], [0], [0], [1], [0, 0, 1, 1], [], []>} : vector<8x4xf32>, vector<4x324xf32>, vector<8x324xf32> -> vector<8x324xf32>
    %22 = arith.addf %16, %21 : vector<8x324xf32>
    %c0_22 = arith.constant 0 : index
    %c0_23 = arith.constant 0 : index
    %c19 = arith.constant 19 : index
    %23 = vector.load %arg1[%c0_22, %c0_23, %c19] : memref<1x4x362xf32, #tpu.memory_space<vmem>>, vector<1x4x324xf32>
    %24 = vector.shape_cast %23 : vector<1x4x324xf32> to vector<4x324xf32>
    %c4 = arith.constant 4 : index
    %c0_24 = arith.constant 0 : index
    %c0_25 = arith.constant 0 : index
    %25 = vector.load %arg2[%c4, %c0_24, %c0_25] : memref<9x8x4xf32, #tpu.memory_space<vmem>>, vector<1x8x4xf32>
    %26 = vector.shape_cast %25 : vector<1x8x4xf32> to vector<8x4xf32>
    %cst_26 = arith.constant dense<0.000000e+00> : vector<8x324xf32>
    %27 = tpu.matmul %26, %24, %cst_26 {dimension_numbers = #tpu.dot_dimension_numbers<[1], [0], [0], [1], [0, 0, 1, 1], [], []>} : vector<8x4xf32>, vector<4x324xf32>, vector<8x324xf32> -> vector<8x324xf32>
    %28 = arith.addf %22, %27 : vector<8x324xf32>
    %c0_27 = arith.constant 0 : index
    %c0_28 = arith.constant 0 : index
    %c20 = arith.constant 20 : index
    %29 = vector.load %arg1[%c0_27, %c0_28, %c20] : memref<1x4x362xf32, #tpu.memory_space<vmem>>, vector<1x4x324xf32>
    %30 = vector.shape_cast %29 : vector<1x4x324xf32> to vector<4x324xf32>
    %c5 = arith.constant 5 : index
    %c0_29 = arith.constant 0 : index
    %c0_30 = arith.constant 0 : index
    %31 = vector.load %arg2[%c5, %c0_29, %c0_30] : memref<9x8x4xf32, #tpu.memory_space<vmem>>, vector<1x8x4xf32>
    %32 = vector.shape_cast %31 : vector<1x8x4xf32> to vector<8x4xf32>
    %cst_31 = arith.constant dense<0.000000e+00> : vector<8x324xf32>
    %33 = tpu.matmul %32, %30, %cst_31 {dimension_numbers = #tpu.dot_dimension_numbers<[1], [0], [0], [1], [0, 0, 1, 1], [], []>} : vector<8x4xf32>, vector<4x324xf32>, vector<8x324xf32> -> vector<8x324xf32>
    %34 = arith.addf %28, %33 : vector<8x324xf32>
    %c0_32 = arith.constant 0 : index
    %c0_33 = arith.constant 0 : index
    %c36 = arith.constant 36 : index
    %35 = vector.load %arg1[%c0_32, %c0_33, %c36] : memref<1x4x362xf32, #tpu.memory_space<vmem>>, vector<1x4x324xf32>
    %36 = vector.shape_cast %35 : vector<1x4x324xf32> to vector<4x324xf32>
    %c6 = arith.constant 6 : index
    %c0_34 = arith.constant 0 : index
    %c0_35 = arith.constant 0 : index
    %37 = vector.load %arg2[%c6, %c0_34, %c0_35] : memref<9x8x4xf32, #tpu.memory_space<vmem>>, vector<1x8x4xf32>
    %38 = vector.shape_cast %37 : vector<1x8x4xf32> to vector<8x4xf32>
    %cst_36 = arith.constant dense<0.000000e+00> : vector<8x324xf32>
    %39 = tpu.matmul %38, %36, %cst_36 {dimension_numbers = #tpu.dot_dimension_numbers<[1], [0], [0], [1], [0, 0, 1, 1], [], []>} : vector<8x4xf32>, vector<4x324xf32>, vector<8x324xf32> -> vector<8x324xf32>
    %40 = arith.addf %34, %39 : vector<8x324xf32>
    %c0_37 = arith.constant 0 : index
    %c0_38 = arith.constant 0 : index
    %c37 = arith.constant 37 : index
    %41 = vector.load %arg1[%c0_37, %c0_38, %c37] : memref<1x4x362xf32, #tpu.memory_space<vmem>>, vector<1x4x324xf32>
    %42 = vector.shape_cast %41 : vector<1x4x324xf32> to vector<4x324xf32>
    %c7 = arith.constant 7 : index
    %c0_39 = arith.constant 0 : index
    %c0_40 = arith.constant 0 : index
    %43 = vector.load %arg2[%c7, %c0_39, %c0_40] : memref<9x8x4xf32, #tpu.memory_space<vmem>>, vector<1x8x4xf32>
    %44 = vector.shape_cast %43 : vector<1x8x4xf32> to vector<8x4xf32>
    %cst_41 = arith.constant dense<0.000000e+00> : vector<8x324xf32>
    %45 = tpu.matmul %44, %42, %cst_41 {dimension_numbers = #tpu.dot_dimension_numbers<[1], [0], [0], [1], [0, 0, 1, 1], [], []>} : vector<8x4xf32>, vector<4x324xf32>, vector<8x324xf32> -> vector<8x324xf32>
    %46 = arith.addf %40, %45 : vector<8x324xf32>
    %c0_42 = arith.constant 0 : index
    %c0_43 = arith.constant 0 : index
    %c38 = arith.constant 38 : index
    %47 = vector.load %arg1[%c0_42, %c0_43, %c38] : memref<1x4x362xf32, #tpu.memory_space<vmem>>, vector<1x4x324xf32>
    %48 = vector.shape_cast %47 : vector<1x4x324xf32> to vector<4x324xf32>
    %c8 = arith.constant 8 : index
    %c0_44 = arith.constant 0 : index
    %c0_45 = arith.constant 0 : index
    %49 = vector.load %arg2[%c8, %c0_44, %c0_45] : memref<9x8x4xf32, #tpu.memory_space<vmem>>, vector<1x8x4xf32>
    %50 = vector.shape_cast %49 : vector<1x8x4xf32> to vector<8x4xf32>
    %cst_46 = arith.constant dense<0.000000e+00> : vector<8x324xf32>
    %51 = tpu.matmul %50, %48, %cst_46 {dimension_numbers = #tpu.dot_dimension_numbers<[1], [0], [0], [1], [0, 0, 1, 1], [], []>} : vector<8x4xf32>, vector<4x324xf32>, vector<8x324xf32> -> vector<8x324xf32>
    %52 = arith.addf %46, %51 : vector<8x324xf32>
    %c0_47 = arith.constant 0 : index
    %c0_48 = arith.constant 0 : index
    %53 = vector.load %arg3[%c0_47, %c0_48] : memref<1x324xf32, #tpu.memory_space<vmem>>, vector<1x324xf32>
    %54 = vector.broadcast %53 : vector<1x324xf32> to vector<8x324xf32>
    %55 = arith.mulf %52, %54 : vector<8x324xf32>
    %cst_49 = arith.constant dense<0.000000e+00> : vector<8xf32>
    %56 = vector.multi_reduction <add>, %55, %cst_49 [1] : vector<8x324xf32> to vector<8xf32>
    %57 = vector.shape_cast %56 : vector<8xf32> to vector<8x1xf32>
    %cst_50 = arith.constant 3.906250e-03 : f32
    %58 = vector.broadcast %cst_50 : f32 to vector<8x1xf32>
    %59 = arith.mulf %57, %58 : vector<8x1xf32>
    %60 = vector.broadcast %59 : vector<8x1xf32> to vector<8x324xf32>
    %61 = arith.subf %52, %60 : vector<8x324xf32>
    %62 = vector.broadcast %53 : vector<1x324xf32> to vector<8x324xf32>
    %63 = arith.mulf %61, %62 : vector<8x324xf32>
    %64 = arith.mulf %63, %63 : vector<8x324xf32>
    %cst_51 = arith.constant dense<0.000000e+00> : vector<8xf32>
    %65 = vector.multi_reduction <add>, %64, %cst_51 [1] : vector<8x324xf32> to vector<8xf32>
    %66 = vector.shape_cast %65 : vector<8xf32> to vector<8x1xf32>
    %cst_52 = arith.constant 3.906250e-03 : f32
    %67 = vector.broadcast %cst_52 : f32 to vector<8x1xf32>
    %68 = arith.mulf %66, %67 : vector<8x1xf32>
    %69 = vector.broadcast %59 : vector<8x1xf32> to vector<8x324xf32>
    %70 = arith.subf %52, %69 : vector<8x324xf32>
    %cst_53 = arith.constant 9.99999974E-6 : f32
    %71 = vector.broadcast %cst_53 : f32 to vector<8x1xf32>
    %72 = arith.addf %68, %71 : vector<8x1xf32>
    %73 = math.rsqrt %72 : vector<8x1xf32>
    %74 = vector.broadcast %73 : vector<8x1xf32> to vector<8x324xf32>
    %75 = arith.mulf %70, %74 : vector<8x324xf32>
    %cst_54 = arith.constant 0.000000e+00 : f32
    %76 = vector.broadcast %cst_54 : f32 to vector<8x324xf32>
    %77 = arith.maximumf %75, %76 : vector<8x324xf32>
    %c0_55 = arith.constant 0 : index
    %c0_56 = arith.constant 0 : index
    %c0_57 = arith.constant 0 : index
    %78 = vector.load %arg4[%c0_55, %c0_56, %c0_57] : memref<1x8x324xf32, #tpu.memory_space<vmem>>, vector<1x8x324xf32>
    %79 = vector.shape_cast %78 : vector<1x8x324xf32> to vector<8x324xf32>
    %80 = vector.shape_cast %77 : vector<8x324xf32> to vector<1x8x324xf32>
    tpu.vector_store %arg4[%c0_55, %c0_56, %c0_57], %80 {strides = array<i32>} : memref<1x8x324xf32, #tpu.memory_space<vmem>>, vector<1x8x324xf32>,
    return
  }
  func.func @transform_0(%arg0: i32) -> (i32, i32, i32) {
    %c0_i32 = arith.constant 0 : i32
    %c0_i32_0 = arith.constant 0 : i32
    %c0_i32_1 = arith.constant 0 : i32
    return %arg0, %c0_i32, %c0_i32_0 : i32, i32, i32
  }
  func.func @transform_1(%arg0: i32) -> (i32, i32, i32) {
    %c0_i32 = arith.constant 0 : i32
    %c0_i32_0 = arith.constant 0 : i32
    %c0_i32_1 = arith.constant 0 : i32
    %c0_i32_2 = arith.constant 0 : i32
    return %c0_i32, %c0_i32_0, %c0_i32_1 : i32, i32, i32
  }
  func.func @transform_2(%arg0: i32) -> (i32, i32) {
    %c0_i32 = arith.constant 0 : i32
    %c0_i32_0 = arith.constant 0 : i32
    %c0_i32_1 = arith.constant 0 : i32
    return %c0_i32, %c0_i32_0 : i32, i32
  }
  func.func @transform_3(%arg0: i32) -> (i32, i32, i32) {
    %c0_i32 = arith.constant 0 : i32
    %c0_i32_0 = arith.constant 0 : i32
    %c0_i32_1 = arith.constant 0 : i32
    return %arg0, %c0_i32, %c0_i32_0 : i32, i32, i32
  }
}

</mosaic_0001>

<llo_original>
// kernel: conv_block_forward.1
$region0: #{conv_block_forward.1}
  #allocation0 [shape = 'u32[]', space=smem, size = 0x4, offset = 0x4, fixed_abs, tag = 'smem constant byte address 0x4 - core index']
  #allocation1 [shape = 'u32[144,128]{1,0:T(1,128)}', space=vmem, size = 0x12000, scoped, tag = 'internal scratch']
  %s0 = inlined_call_operand.vmem [shape: f32[2,4,362], index: 0, kind: input, shape index: {}]
  %s1 = inlined_call_operand.vmem [shape: f32[9,8,4], index: 1, kind: input, shape index: {}]
  %s2 = inlined_call_operand.vmem [shape: f32[1,324], index: 2, kind: input, shape index: {}]
  %s3 = inlined_call_operand.vmem [shape: f32[2,8,324], index: 3, kind: output, shape index: {}]
  %s4 = sld [smem:[#allocation0]]
  $region45: #{conv_block_forward.1} parent=0
    _
  %s6 = ssub.s32 1, %s4
  %s7 = scalar_select 0, %s6, %s4
  loop: start=0, step=1, limit=4
  $region2: #{conv_block_forward.1} parent=0 // loop_pre_header
    _
  $region3: #{conv_block_forward.1} parent=0 // loop_header
    %s9 = sphi 0, %s13
    %p10 = scmp.ge.s32.totalorder %s9, 4
    %s19 = sphi 0, %s21
    %s22 = sphi 0, %s19
    %s23 = sphi 0, %s22
    %s39 = sphi 0, %s23
    %s43 = sphi 0, %s43
    %s45 = sphi 0, %s43
    %s46 = sphi 0, %s45
    %s60 = sphi 0, %s46
    %s64 = sphi 0, %s64
    %s66 = sphi 0, %s64
    %s67 = sphi 0, %s66
    %s81 = sphi 0, %s67
    %s87 = sphi 0, %s89
    %s90 = sphi 0, %s87
    %s91 = sphi 0, %s90
    %s107 = sphi 0, %s91
  $region4: #{conv_block_forward.1} parent=0 // loop_header_branch
    %12 = sbr.rel (%p10) target = $region8
  $region5: #{conv_block_forward.1} parent=0 // loop_body
    %s14 = ssub.s32 %s9, 1
    %s15 = ssub.s32 %s9, 2
    %s16 = sadd.s32 %s9, 1
    %s17 = ssub.s32 %s9, %s16
    %p18 = scmp.eq.s32.totalorder %s17, 0
    %s20 = sadd.s32 %s19, 1
    %s21 = scalar_select %p18, %s19, %s20
    %p24 = pneg %p18
    %p25 = scmp.eq.s32.totalorder %s9, 1
    %p26 = por %p24, %p25
    %p27 = scmp.ne.s32.totalorder %s19, %s22
    %p28 = scmp.eq.s32.totalorder %s9, 0
    %p29 = por %p27, %p28
    %p30 = scmp.ne.s32.totalorder %s19, %s22
    %p31 = scmp.eq.s32.totalorder %s14, 1
    %p32 = por %p30, %p31
    %p33 = scmp.ne.s32.totalorder %s22, %s23
    %p34 = scmp.eq.s32.totalorder %s14, 0
    %p35 = por %p33, %p34
    %p36 = scmp.ne.s32.totalorder %s22, %s23
    %p37 = scmp.eq.s32.totalorder %s15, 1
    %p38 = por %p36, %p37
    %p40 = scmp.ne.s32.totalorder %s23, %s39
    %p41 = scmp.eq.s32.totalorder %s15, 0
    %p42 = por %p40, %p41
    %s44 = sadd.s32 %s43, 1
    %p47 = scmp.eq.s32.totalorder %s9, 1
    %p48 = scmp.ne.s32.totalorder %s43, %s45
    %p49 = scmp.eq.s32.totalorder %s9, 0
    %p50 = por %p48, %p49
    %p51 = scmp.ne.s32.totalorder %s43, %s45
    %p52 = scmp.eq.s32.totalorder %s14, 1
    %p53 = por %p51, %p52
    %p54 = scmp.ne.s32.totalorder %s45, %s46
    %p55 = scmp.eq.s32.totalorder %s14, 0
    %p56 = por %p54, %p55
    %p57 = scmp.ne.s32.totalorder %s45, %s46
    %p58 = scmp.eq.s32.totalorder %s15, 1
    %p59 = por %p57, %p58
    %p61 = scmp.ne.s32.totalorder %s46, %s60
    %p62 = scmp.eq.s32.totalorder %s15, 0
    %p63 = por %p61, %p62
    %s65 = sadd.s32 %s64, 1
    %p68 = scmp.eq.s32.totalorder %s9, 1
    %p69 = scmp.ne.s32.totalorder %s64, %s66
    %p70 = scmp.eq.s32.totalorder %s9, 0
    %p71 = por %p69, %p70
    %p72 = scmp.ne.s32.totalorder %s64, %s66
    %p73 = scmp.eq.s32.totalorder %s14, 1
    %p74 = por %p72, %p73
    %p75 = scmp.ne.s32.totalorder %s66, %s67
    %p76 = scmp.eq.s32.totalorder %s14, 0
    %p77 = por %p75, %p76
    %p78 = scmp.ne.s32.totalorder %s66, %s67
    %p79 = scmp.eq.s32.totalorder %s15, 1
    %p80 = por %p78, %p79
    %p82 = scmp.ne.s32.totalorder %s67, %s81
    %p83 = scmp.eq.s32.totalorder %s15, 0
    %p84 = por %p82, %p83
    %s85 = ssub.s32 %s9, %s16
    %p86 = scmp.eq.s32.totalorder %s85, 0
    %s88 = sadd.s32 %s87, 1
    %s89 = scalar_select %p86, %s87, %s88
    %p92 = pneg %p86
    %p93 = scmp.eq.s32.totalorder %s9, 1
    %p94 = por %p92, %p93
    %p95 = scmp.ne.s32.totalorder %s87, %s90
    %p96 = scmp.eq.s32.totalorder %s9, 0
    %p97 = por %p95, %p96
    %p98 = scmp.ne.s32.totalorder %s87, %s90
    %p99 = scmp.eq.s32.totalorder %s14, 1
    %p100 = por %p98, %p99
    %p101 = scmp.ne.s32.totalorder %s90, %s91
    %p102 = scmp.eq.s32.totalorder %s14, 0
    %p103 = por %p101, %p102
    %p104 = scmp.ne.s32.totalorder %s90, %s91
    %p105 = scmp.eq.s32.totalorder %s15, 1
    %p106 = por %p104, %p105
    %p108 = scmp.ne.s32.totalorder %s91, %s107
    %p109 = scmp.eq.s32.totalorder %s15, 0
    %p110 = por %p108, %p109
    %p111 = scmp.le.s32.totalorder 1, %s9
    %p112 = scmp.lt.s32.totalorder %s9, 3
    %p113 = pnand %p111, %p112
    %p114 = pneg %p113
    // Predicated region
    $region9: #{conv_block_forward.1} parent=5 // pred_check
      _
    $region10: #{conv_block_forward.1} parent=5 // pred_check_branch
      %116 = sbr.rel (%p113) target = $region12
    $region11: #{conv_block_forward.1} parent=5 // pred_region
      %s117 = ssub.s32 %s9, 1
      // Predicated region
      $region13: #{conv_block_forward.1} parent=11 // pred_check
        %p118 = pneg %p56
      $region14: #{conv_block_forward.1} parent=11 // pred_check_branch
        %120 = sbr.rel (%p118) target = $region16
      $region15: #{conv_block_forward.1} parent=11 // pred_region
        _
      $region16: #{conv_block_forward.1} parent=11 // pred_fallthru
        _
      // Predicated region
      $region17: #{conv_block_forward.1} parent=11 // pred_check
        %p121 = pneg %p77
      $region18: #{conv_block_forward.1} parent=11 // pred_check_branch
        %123 = sbr.rel (%p121) target = $region20
      $region19: #{conv_block_forward.1} parent=11 // pred_region
        _
      $region20: #{conv_block_forward.1} parent=11 // pred_fallthru
        _
    $region12: #{conv_block_forward.1} parent=5 // pred_fallthru
      _
    %p124 = scmp.lt.s32.totalorder %s9, 2
    // Predicated region
    $region21: #{conv_block_forward.1} parent=5 // pred_check
      %p125 = pneg %p124
    $region22: #{conv_block_forward.1} parent=5 // pred_check_branch
      %127 = sbr.rel (%p125) target = $region24
    $region23: #{conv_block_forward.1} parent=5 // pred_region
      // Predicated region
      $region25: #{conv_block_forward.1} parent=23 // pred_check
        %p128 = pneg %p29
      $region26: #{conv_block_forward.1} parent=23 // pred_check_branch
        %130 = sbr.rel (%p128) target = $region28
      $region27: #{conv_block_forward.1} parent=23 // pred_region
        %p131 = scmp.lt.s32.totalorder %s9, 1
        %s132 = scalar_select %p131, %s9, 1
        %s133 = smul.addr %s132, 3
        %s134 = smul.addr %s133, 4
        %s135 = scalar_lea.vmem %s0, %s134
      $region28: #{conv_block_forward.1} parent=23 // pred_fallthru
        _
    $region24: #{conv_block_forward.1} parent=5 // pred_fallthru
      _
    %p136 = scmp.le.s32.totalorder 1, %s9
    %p137 = scmp.lt.s32.totalorder %s9, 3
    %p138 = pnand %p136, %p137
    %p139 = pneg %p138
    // Predicated region
    $region29: #{conv_block_forward.1} parent=5 // pred_check
      _
    $region30: #{conv_block_forward.1} parent=5 // pred_check_branch
      %141 = sbr.rel (%p138) target = $region32
    $region31: #{conv_block_forward.1} parent=5 // pred_region
      %s142 = ssub.s32 %s9, 1
      %p143 = scmp.lt.s32.totalorder %s14, 1
      %s144 = scalar_select %p143, %s14, 1
      %s145 = smul.addr %s144, 3
      %s146 = smul.addr %s145, 4
      %s147 = scalar_lea.vmem %s0, %s146
      %p148 = pneg %p35
      %p149 = pneg %p32
      %p150 = pneg %p56
      %p151 = pneg %p53
      %p152 = pneg %p77
      %p153 = pneg %p74
      %p154 = pneg %p103
      %p155 = pneg %p100
      %p156 = scmp.lt.s32.totalorder %s14, 1
      %s157 = scalar_select %p156, %s14, 1
      %s158 = smul.addr %s157, 3
      %s159 = smul.addr %s158, 8
      %s160 = scalar_lea.vmem %s3, %s159
      %p161 = scmp.lt.s32.totalorder %s14, 1
      %s162 = scalar_select %p161, %s14, 1
      %s163 = smul.addr %s162, 3
      %s164 = smul.addr %s163, 4
      %s165 = scalar_lea.vmem %s0, %s164
      %p166 = scmp.lt.s32.totalorder %s14, 1
      %s167 = scalar_select %p166, %s14, 1
      %s168 = smul.addr %s167, 3
      %s169 = smul.addr %s168, 8
      %s170 = scalar_lea.vmem %s3, %s169
      %v171 = vld [vmem:[%s165] sm:$0xff]
      %v172 = vld [vmem:[%s165 + $0x8] sm:$0xf]
      %v173 = vld [vmem:[%s1] sm:$0xff]
      %s174 = scalar_lea.vmem %s1, 8
      %v175 = vld [vmem:[%s174] sm:$0xff]
      %v178 = vcombine.high %v171, %v171
      %179 = vrot.lane.b32.xlu0 %v171, 127
      %v180 = vpop.permute.xlu0 %179
      %181 = vrot.lane.b32.xlu0 %v178, 127
      %v182 = vpop.permute.xlu0 %181
      %183 = vrot.lane.b32.xlu0 %v172, 127
      %v184 = vpop.permute.xlu0 %183
      %vm185 = vcmask 1039360
      %v186 = vsel %vm185, %v180, %v182
      %v187 = vsel %vm185, %v182, %v184
      %vm188 = vcmask 31744
      %v190 = vsel %vm188, %v175, 0
      %vm192 = vcmask 1043456
      %v193 = vsel %vm192, %v186, 0
      %v195 = vsel %vm192, %v187, 0
      %v197 = vsel %vm192, %v184, 0
      %199 = vmatprep.subr.mxu0 %v195
      %200 = vmatpush1.msra.mxu0 %v193
      %201 = vmatprep.subr.mxu0 0.0
      %202 = vmatpush1.msra.mxu0 0.0
      %203 = vmatprep.subr.mxu0 0.0
      %204 = vmatpush1.msra.mxu0 0.0
      %205 = vmatprep.subr.mxu0 0.0
      %206 = vmatpush1.msra.mxu0 0.0
      %207 = vmatprep.subr.mxu0 0.0
      %208 = vmatpush1.msra.mxu0 0.0
      %209 = vmatprep.subr.mxu0 0.0
      %210 = vmatpush1.msra.mxu0 0.0
      %211 = vmatprep.subr.mxu0 0.0
      %212 = vmatpush1.msra.mxu0 0.0
      %213 = vmatprep.subr.mxu0 0.0
      %214 = vmatpush1.msra.mxu0 0.0
      %215 = vmatprep.subr.mxu0 0.0
      %216 = vmatpush1.msra.mxu0 0.0
      %217 = vmatprep.subr.mxu0 0.0
      %218 = vmatpush1.msra.mxu0 0.0
      %219 = vmatprep.subr.mxu0 0.0
      %220 = vmatpush1.msra.mxu0 0.0
      %221 = vmatprep.subr.mxu0 0.0
      %222 = vmatpush1.msra.mxu0 0.0
      %223 = vmatprep.subr.mxu0 0.0
      %224 = vmatpush1.msra.mxu0 0.0
      %225 = vmatprep.subr.mxu0 0.0
      %226 = vmatpush1.msra.mxu0 0.0
      %227 = vmatprep.subr.mxu0 0.0
      %228 = vmatpush1.msra.mxu0 0.0
      %229 = vmatprep.subr.mxu0 0.0
      %230 = vmatpush1.msra.mxu0 0.0
      %231 = vmatprep.subr.mxu0 0.0
      %232 = vmatpush1.msra.mxu0 0.0
      %233 = vmatprep.subr.mxu0 0.0
      %234 = vmatpush1.msra.mxu0 0.0
      %235 = vmatprep.subr.mxu0 0.0
      %236 = vmatpush1.msra.mxu0 0.0
      %237 = vmatprep.subr.mxu0 0.0
      %238 = vmatpush1.msra.mxu0 0.0
      %239 = vmatprep.subr.mxu0 0.0
      %240 = vmatpush1.msra.mxu0 0.0
      %241 = vmatprep.subr.mxu0 0.0
      %242 = vmatpush1.msra.mxu0 0.0
      %243 = vmatprep.subr.mxu0 0.0
      %244 = vmatpush1.msra.mxu0 0.0
      %245 = vmatprep.subr.mxu0 0.0
      %246 = vmatpush1.msra.mxu0 0.0
      %247 = vmatprep.subr.mxu0 0.0
      %248 = vmatpush1.msra.mxu0 0.0
      %249 = vmatprep.subr.mxu0 0.0
      %250 = vmatpush1.msra.mxu0 0.0
      %251 = vmatprep.subr.mxu0 0.0
      %252 = vmatpush1.msra.mxu0 0.0
      %253 = vmatprep.subr.mxu0 0.0
      %254 = vmatpush1.msra.mxu0 0.0
      %255 = vmatprep.subr.mxu0 0.0
      %256 = vmatpush1.msra.mxu0 0.0
      %257 = vmatprep.subr.mxu0 0.0
      %258 = vmatpush1.msra.mxu0 0.0
      %259 = vmatprep.subr.mxu0 0.0
      %260 = vmatpush1.msra.mxu0 0.0
      %261 = vmatprep.subr.mxu0 0.0
      %262 = vmatpush1.msra.mxu0 0.0
      %263 = vmatprep.mubr.f32.mxu0 0.0
      %264 = vmatmul.mubr.f32.gmra.mrb[0].mxu0 %v190
      %v265 = vpop.f32.mrb[0].mxu0
      %v266 = vadd.f32 0.0, %v265
      %v267 = vpop.f32.mrb[0].mxu0
      %v268 = vadd.f32 0.0, %v267
      %269 = vdwg.mxu0
      %270 = vmatprep.subr.mxu0 0.0
      %271 = vmatpush1.msra.mxu0 %v197
      %272 = vmatprep.subr.mxu0 0.0
      %273 = vmatpush1.msra.mxu0 0.0
      %274 = vmatprep.subr.mxu0 0.0
      %275 = vmatpush1.msra.mxu0 0.0
      %276 = vmatprep.subr.mxu0 0.0
      %277 = vmatpush1.msra.mxu0 0.0
      %278 = vmatprep.subr.mxu0 0.0
      %279 = vmatpush1.msra.mxu0 0.0
      %280 = vmatprep.subr.mxu0 0.0
      %281 = vmatpush1.msra.mxu0 0.0
      %282 = vmatprep.subr.mxu0 0.0
      %283 = vmatpush1.msra.mxu0 0.0
      %284 = vmatprep.subr.mxu0 0.0
      %285 = vmatpush1.msra.mxu0 0.0
      %286 = vmatprep.subr.mxu0 0.0
      %287 = vmatpush1.msra.mxu0 0.0
      %288 = vmatprep.subr.mxu0 0.0
      %289 = vmatpush1.msra.mxu0 0.0
      %290 = vmatprep.subr.mxu0 0.0
      %291 = vmatpush1.msra.mxu0 0.0
      %292 = vmatprep.subr.mxu0 0.0
      %293 = vmatpush1.msra.mxu0 0.0
      %294 = vmatprep.subr.mxu0 0.0
      %295 = vmatpush1.msra.mxu0 0.0
      %296 = vmatprep.subr.mxu0 0.0
      %297 = vmatpush1.msra.mxu0 0.0
      %298 = vmatprep.subr.mxu0 0.0
      %299 = vmatpush1.msra.mxu0 0.0
      %300 = vmatprep.subr.mxu0 0.0
      %301 = vmatpush1.msra.mxu0 0.0
      %302 = vmatprep.subr.mxu0 0.0
      %303 = vmatpush1.msra.mxu0 0.0
      %304 = vmatprep.subr.mxu0 0.0
      %305 = vmatpush1.msra.mxu0 0.0
      %306 = vmatprep.subr.mxu0 0.0
      %307 = vmatpush1.msra.mxu0 0.0
      %308 = vmatprep.subr.mxu0 0.0
      %309 = vmatpush1.msra.mxu0 0.0
      %310 = vmatprep.subr.mxu0 0.0
      %311 = vmatpush1.msra.mxu0 0.0
      %312 = vmatprep.subr.mxu0 0.0
      %313 = vmatpush1.msra.mxu0 0.0
      %314 = vmatprep.subr.mxu0 0.0
      %315 = vmatpush1.msra.mxu0 0.0
      %316 = vmatprep.subr.mxu0 0.0
      %317 = vmatpush1.msra.mxu0 0.0
      %318 = vmatprep.subr.mxu0 0.0
      %319 = vmatpush1.msra.mxu0 0.0
      %320 = vmatprep.subr.mxu0 0.0
      %321 = vmatpush1.msra.mxu0 0.0
      %322 = vmatprep.subr.mxu0 0.0
      %323 = vmatpush1.msra.mxu0 0.0
      %324 = vmatprep.subr.mxu0 0.0
      %325 = vmatpush1.msra.mxu0 0.0
      %326 = vmatprep.subr.mxu0 0.0
      %327 = vmatpush1.msra.mxu0 0.0
      %328 = vmatprep.subr.mxu0 0.0
      %329 = vmatpush1.msra.mxu0 0.0
      %330 = vmatprep.subr.mxu0 0.0
      %331 = vmatpush1.msra.mxu0 0.0
      %332 = vmatprep.subr.mxu0 0.0
      %333 = vmatpush1.msra.mxu0 0.0
      %334 = vmatprep.mubr.f32.mxu0 0.0
      %335 = vmatmul.mubr.f32.gmra.mrb[0].mxu0 %v190
      %v336 = vpop.f32.mrb[0].mxu0
      %v337 = vadd.f32 0.0, %v336
      %v338 = vpop.f32.mrb[0].mxu0
      %339 = vdwg.mxu0
      %v341 = vsel %vm188, %v173, 0
      %v343 = vsel %vm192, %v171, 0
      %v345 = vsel %vm192, %v178, 0
      %v347 = vsel %vm192, %v172, 0
      %349 = vmatprep.subr.mxu0 %v345
      %350 = vmatpush1.msra.mxu0 %v343
      %351 = vmatprep.subr.mxu0 0.0
      %352 = vmatpush1.msra.mxu0 0.0
      %353 = vmatprep.subr.mxu0 0.0
      %354 = vmatpush1.msra.mxu0 0.0
      %355 = vmatprep.subr.mxu0 0.0
      %356 = vmatpush1.msra.mxu0 0.0
      %357 = vmatprep.subr.mxu0 0.0
      %358 = vmatpush1.msra.mxu0 0.0
      %359 = vmatprep.subr.mxu0 0.0
      %360 = vmatpush1.msra.mxu0 0.0
      %361 = vmatprep.subr.mxu0 0.0
      %362 = vmatpush1.msra.mxu0 0.0
      %363 = vmatprep.subr.mxu0 0.0
      %364 = vmatpush1.msra.mxu0 0.0
      %365 = vmatprep.subr.mxu0 0.0
      %366 = vmatpush1.msra.mxu0 0.0
      %367 = vmatprep.subr.mxu0 0.0
      %368 = vmatpush1.msra.mxu0 0.0
      %369 = vmatprep.subr.mxu0 0.0
      %370 = vmatpush1.msra.mxu0 0.0
      %371 = vmatprep.subr.mxu0 0.0
      %372 = vmatpush1.msra.mxu0 0.0
      %373 = vmatprep.subr.mxu0 0.0
      %374 = vmatpush1.msra.mxu0 0.0
      %375 = vmatprep.subr.mxu0 0.0
      %376 = vmatpush1.msra.mxu0 0.0
      %377 = vmatprep.subr.mxu0 0.0
      %378 = vmatpush1.msra.mxu0 0.0
      %379 = vmatprep.subr.mxu0 0.0
      %380 = vmatpush1.msra.mxu0 0.0
      %381 = vmatprep.subr.mxu0 0.0
      %382 = vmatpush1.msra.mxu0 0.0
      %383 = vmatprep.subr.mxu0 0.0
      %384 = vmatpush1.msra.mxu0 0.0
      %385 = vmatprep.subr.mxu0 0.0
      %386 = vmatpush1.msra.mxu0 0.0
      %387 = vmatprep.subr.mxu0 0.0
      %388 = vmatpush1.msra.mxu0 0.0
      %389 = vmatprep.subr.mxu0 0.0
      %390 = vmatpush1.msra.mxu0 0.0
      %391 = vmatprep.subr.mxu0 0.0
      %392 = vmatpush1.msra.mxu0 0.0
      %393 = vmatprep.subr.mxu0 0.0
      %394 = vmatpush1.msra.mxu0 0.0
      %395 = vmatprep.subr.mxu0 0.0
      %396 = vmatpush1.msra.mxu0 0.0
      %397 = vmatprep.subr.mxu0 0.0
      %398 = vmatpush1.msra.mxu0 0.0
      %399 = vmatprep.subr.mxu0 0.0
      %400 = vmatpush1.msra.mxu0 0.0
      %401 = vmatprep.subr.mxu0 0.0
      %402 = vmatpush1.msra.mxu0 0.0
      %403 = vmatprep.subr.mxu0 0.0
      %404 = vmatpush1.msra.mxu0 0.0
      %405 = vmatprep.subr.mxu0 0.0
      %406 = vmatpush1.msra.mxu0 0.0
      %407 = vmatprep.subr.mxu0 0.0
      %408 = vmatpush1.msra.mxu0 0.0
      %409 = vmatprep.subr.mxu0 0.0
      %410 = vmatpush1.msra.mxu0 0.0
      %411 = vmatprep.subr.mxu0 0.0
      %412 = vmatpush1.msra.mxu0 0.0
      %413 = vmatprep.mubr.f32.mxu0 0.0
      %414 = vmatmul.mubr.f32.gmra.mrb[0].mxu0 %v341
      %v415 = vpop.f32.mrb[0].mxu0
      %v416 = vadd.f32 %v266, %v415
      %v417 = vpop.f32.mrb[0].mxu0
      %v418 = vadd.f32 %v268, %v417
      %419 = vdwg.mxu0
      %420 = vmatprep.subr.mxu0 0.0
      %421 = vmatpush1.msra.mxu0 %v347
      %422 = vmatprep.subr.mxu0 0.0
      %423 = vmatpush1.msra.mxu0 0.0
      %424 = vmatprep.subr.mxu0 0.0
      %425 = vmatpush1.msra.mxu0 0.0
      %426 = vmatprep.subr.mxu0 0.0
      %427 = vmatpush1.msra.mxu0 0.0
      %428 = vmatprep.subr.mxu0 0.0
      %429 = vmatpush1.msra.mxu0 0.0
      %430 = vmatprep.subr.mxu0 0.0
      %431 = vmatpush1.msra.mxu0 0.0
      %432 = vmatprep.subr.mxu0 0.0
      %433 = vmatpush1.msra.mxu0 0.0
      %434 = vmatprep.subr.mxu0 0.0
      %435 = vmatpush1.msra.mxu0 0.0
      %436 = vmatprep.subr.mxu0 0.0
      %437 = vmatpush1.msra.mxu0 0.0
      %438 = vmatprep.subr.mxu0 0.0
      %439 = vmatpush1.msra.mxu0 0.0
      %440 = vmatprep.subr.mxu0 0.0
      %441 = vmatpush1.msra.mxu0 0.0
      %442 = vmatprep.subr.mxu0 0.0
      %443 = vmatpush1.msra.mxu0 0.0
      %444 = vmatprep.subr.mxu0 0.0
      %445 = vmatpush1.msra.mxu0 0.0
      %446 = vmatprep.subr.mxu0 0.0
      %447 = vmatpush1.msra.mxu0 0.0
      %448 = vmatprep.subr.mxu0 0.0
      %449 = vmatpush1.msra.mxu0 0.0
      %450 = vmatprep.subr.mxu0 0.0
      %451 = vmatpush1.msra.mxu0 0.0
      %452 = vmatprep.subr.mxu0 0.0
      %453 = vmatpush1.msra.mxu0 0.0
      %454 = vmatprep.subr.mxu0 0.0
      %455 = vmatpush1.msra.mxu0 0.0
      %456 = vmatprep.subr.mxu0 0.0
      %457 = vmatpush1.msra.mxu0 0.0
      %458 = vmatprep.subr.mxu0 0.0
      %459 = vmatpush1.msra.mxu0 0.0
      %460 = vmatprep.subr.mxu0 0.0
      %461 = vmatpush1.msra.mxu0 0.0
      %462 = vmatprep.subr.mxu0 0.0
      %463 = vmatpush1.msra.mxu0 0.0
      %464 = vmatprep.subr.mxu0 0.0
      %465 = vmatpush1.msra.mxu0 0.0
      %466 = vmatprep.subr.mxu0 0.0
      %467 = vmatpush1.msra.mxu0 0.0
      %468 = vmatprep.subr.mxu0 0.0
      %469 = vmatpush1.msra.mxu0 0.0
      %470 = vmatprep.subr.mxu0 0.0
      %471 = vmatpush1.msra.mxu0 0.0
      %472 = vmatprep.subr.mxu0 0.0
      %473 = vmatpush1.msra.mxu0 0.0
      %474 = vmatprep.subr.mxu0 0.0
      %475 = vmatpush1.msra.mxu0 0.0
      %476 = vmatprep.subr.mxu0 0.0
      %477 = vmatpush1.msra.mxu0 0.0
      %478 = vmatprep.subr.mxu0 0.0
      %479 = vmatpush1.msra.mxu0 0.0
      %480 = vmatprep.subr.mxu0 0.0
      %481 = vmatpush1.msra.mxu0 0.0
      %482 = vmatprep.subr.mxu0 0.0
      %483 = vmatpush1.msra.mxu0 0.0
      %484 = vmatprep.mubr.f32.mxu0 0.0
      %485 = vmatmul.mubr.f32.gmra.mrb[0].mxu0 %v341
      %v486 = vpop.f32.mrb[0].mxu0
      %v487 = vadd.f32 %v337, %v486
      %v488 = vpop.f32.mrb[0].mxu0
      %489 = vdwg.mxu0
      %v490 = vld [vmem:[%s165] sm:$0xff]
      %v491 = vld [vmem:[%s165 + $0x8] sm:$0xf]
      %s492 = scalar_lea.vmem %s1, 16
      %v493 = vld [vmem:[%s492] sm:$0xff]
      %v496 = vcombine.high %v490, %v490
      %497 = vrot.lane.b32.xlu0 %v490, 126
      %v498 = vpop.permute.xlu0 %497
      %499 = vrot.lane.b32.xlu0 %v496, 126
      %v500 = vpop.permute.xlu0 %499
      %501 = vrot.lane.b32.xlu0 %v491, 126
      %v502 = vpop.permute.xlu0 %501
      %vm503 = vcmask 1031168
      %v504 = vsel %vm503, %v498, %v500
      %v505 = vsel %vm503, %v500, %v502
      %v507 = vsel %vm188, %v493, 0
      %v509 = vsel %vm192, %v504, 0
      %v511 = vsel %vm192, %v505, 0
      %v513 = vsel %vm192, %v502, 0
      %515 = vmatprep.subr.mxu0 %v511
      %516 = vmatpush1.msra.mxu0 %v509
      %517 = vmatprep.subr.mxu0 0.0
      %518 = vmatpush1.msra.mxu0 0.0
      %519 = vmatprep.subr.mxu0 0.0
      %520 = vmatpush1.msra.mxu0 0.0
      %521 = vmatprep.subr.mxu0 0.0
      %522 = vmatpush1.msra.mxu0 0.0
      %523 = vmatprep.subr.mxu0 0.0
      %524 = vmatpush1.msra.mxu0 0.0
      %525 = vmatprep.subr.mxu0 0.0
      %526 = vmatpush1.msra.mxu0 0.0
      %527 = vmatprep.subr.mxu0 0.0
      %528 = vmatpush1.msra.mxu0 0.0
      %529 = vmatprep.subr.mxu0 0.0
      %530 = vmatpush1.msra.mxu0 0.0
      %531 = vmatprep.subr.mxu0 0.0
      %532 = vmatpush1.msra.mxu0 0.0
      %533 = vmatprep.subr.mxu0 0.0
      %534 = vmatpush1.msra.mxu0 0.0
      %535 = vmatprep.subr.mxu0 0.0
      %536 = vmatpush1.msra.mxu0 0.0
      %537 = vmatprep.subr.mxu0 0.0
      %538 = vmatpush1.msra.mxu0 0.0
      %539 = vmatprep.subr.mxu0 0.0
      %540 = vmatpush1.msra.mxu0 0.0
      %541 = vmatprep.subr.mxu0 0.0
      %542 = vmatpush1.msra.mxu0 0.0
      %543 = vmatprep.subr.mxu0 0.0
      %544 = vmatpush1.msra.mxu0 0.0
      %545 = vmatprep.subr.mxu0 0.0
      %546 = vmatpush1.msra.mxu0 0.0
      %547 = vmatprep.subr.mxu0 0.0
      %548 = vmatpush1.msra.mxu0 0.0
      %549 = vmatprep.subr.mxu0 0.0
      %550 = vmatpush1.msra.mxu0 0.0
      %551 = vmatprep.subr.mxu0 0.0
      %552 = vmatpush1.msra.mxu0 0.0
      %553 = vmatprep.subr.mxu0 0.0
      %554 = vmatpush1.msra.mxu0 0.0
      %555 = vmatprep.subr.mxu0 0.0
      %556 = vmatpush1.msra.mxu0 0.0
      %557 = vmatprep.subr.mxu0 0.0
      %558 = vmatpush1.msra.mxu0 0.0
      %559 = vmatprep.subr.mxu0 0.0
      %560 = vmatpush1.msra.mxu0 0.0
      %561 = vmatprep.subr.mxu0 0.0
      %562 = vmatpush1.msra.mxu0 0.0
      %563 = vmatprep.subr.mxu0 0.0
      %564 = vmatpush1.msra.mxu0 0.0
      %565 = vmatprep.subr.mxu0 0.0
      %566 = vmatpush1.msra.mxu0 0.0
      %567 = vmatprep.subr.mxu0 0.0
      %568 = vmatpush1.msra.mxu0 0.0
      %569 = vmatprep.subr.mxu0 0.0
      %570 = vmatpush1.msra.mxu0 0.0
      %571 = vmatprep.subr.mxu0 0.0
      %572 = vmatpush1.msra.mxu0 0.0
      %573 = vmatprep.subr.mxu0 0.0
      %574 = vmatpush1.msra.mxu0 0.0
      %575 = vmatprep.subr.mxu0 0.0
      %576 = vmatpush1.msra.mxu0 0.0
      %577 = vmatprep.subr.mxu0 0.0
      %578 = vmatpush1.msra.mxu0 0.0
      %579 = vmatprep.mubr.f32.mxu0 0.0
      %580 = vmatmul.mubr.f32.gmra.mrb[0].mxu0 %v507
      %v581 = vpop.f32.mrb[0].mxu0
      %v582 = vadd.f32 0.0, %v581
      %v583 = vpop.f32.mrb[0].mxu0
      %v584 = vadd.f32 0.0, %v583
      %585 = vdwg.mxu0
      %586 = vmatprep.subr.mxu0 0.0
      %587 = vmatpush1.msra.mxu0 %v513
      %588 = vmatprep.subr.mxu0 0.0
      %589 = vmatpush1.msra.mxu0 0.0
      %590 = vmatprep.subr.mxu0 0.0
      %591 = vmatpush1.msra.mxu0 0.0
      %592 = vmatprep.subr.mxu0 0.0
      %593 = vmatpush1.msra.mxu0 0.0
      %594 = vmatprep.subr.mxu0 0.0
      %595 = vmatpush1.msra.mxu0 0.0
      %596 = vmatprep.subr.mxu0 0.0
      %597 = vmatpush1.msra.mxu0 0.0
      %598 = vmatprep.subr.mxu0 0.0
      %599 = vmatpush1.msra.mxu0 0.0
      %600 = vmatprep.subr.mxu0 0.0
      %601 = vmatpush1.msra.mxu0 0.0
      %602 = vmatprep.subr.mxu0 0.0
      %603 = vmatpush1.msra.mxu0 0.0
      %604 = vmatprep.subr.mxu0 0.0
      %605 = vmatpush1.msra.mxu0 0.0
      %606 = vmatprep.subr.mxu0 0.0
      %607 = vmatpush1.msra.mxu0 0.0
      %608 = vmatprep.subr.mxu0 0.0
      %609 = vmatpush1.msra.mxu0 0.0
      %610 = vmatprep.subr.mxu0 0.0
      %611 = vmatpush1.msra.mxu0 0.0
      %612 = vmatprep.subr.mxu0 0.0
      %613 = vmatpush1.msra.mxu0 0.0
      %614 = vmatprep.subr.mxu0 0.0
      %615 = vmatpush1.msra.mxu0 0.0
      %616 = vmatprep.subr.mxu0 0.0
      %617 = vmatpush1.msra.mxu0 0.0
      %618 = vmatprep.subr.mxu0 0.0
      %619 = vmatpush1.msra.mxu0 0.0
      %620 = vmatprep.subr.mxu0 0.0
      %621 = vmatpush1.msra.mxu0 0.0
      %622 = vmatprep.subr.mxu0 0.0
      %623 = vmatpush1.msra.mxu0 0.0
      %624 = vmatprep.subr.mxu0 0.0
      %625 = vmatpush1.msra.mxu0 0.0
      %626 = vmatprep.subr.mxu0 0.0
      %627 = vmatpush1.msra.mxu0 0.0
      %628 = vmatprep.subr.mxu0 0.0
      %629 = vmatpush1.msra.mxu0 0.0
      %630 = vmatprep.subr.mxu0 0.0
      %631 = vmatpush1.msra.mxu0 0.0
      %632 = vmatprep.subr.mxu0 0.0
      %633 = vmatpush1.msra.mxu0 0.0
      %634 = vmatprep.subr.mxu0 0.0
      %635 = vmatpush1.msra.mxu0 0.0
      %636 = vmatprep.subr.mxu0 0.0
      %637 = vmatpush1.msra.mxu0 0.0
      %638 = vmatprep.subr.mxu0 0.0
      %639 = vmatpush1.msra.mxu0 0.0
      %640 = vmatprep.subr.mxu0 0.0
      %641 = vmatpush1.msra.mxu0 0.0
      %642 = vmatprep.subr.mxu0 0.0
      %643 = vmatpush1.msra.mxu0 0.0
      %644 = vmatprep.subr.mxu0 0.0
      %645 = vmatpush1.msra.mxu0 0.0
      %646 = vmatprep.subr.mxu0 0.0
      %647 = vmatpush1.msra.mxu0 0.0
      %648 = vmatprep.subr.mxu0 0.0
      %649 = vmatpush1.msra.mxu0 0.0
      %650 = vmatprep.mubr.f32.mxu0 0.0
      %651 = vmatmul.mubr.f32.gmra.mrb[0].mxu0 %v507
      %v652 = vpop.f32.mrb[0].mxu0
      %v653 = vadd.f32 0.0, %v652
      %v654 = vpop.f32.mrb[0].mxu0
      %655 = vdwg.mxu0
      %v656 = vadd.f32 %v416, %v582
      %v657 = vadd.f32 %v418, %v584
      %v658 = vadd.f32 %v487, %v653
      %v659 = vld [vmem:[%s165] sm:$0xff]
      %v660 = vld [vmem:[%s165 + $0x8] sm:$0xf]
      %s661 = scalar_lea.vmem %s1, 24
      %v662 = vld [vmem:[%s661] sm:$0xff]
      %v665 = vcombine.high %v659, %v659
      %666 = vrot.lane.b32.xlu0 %v659, 110
      %v667 = vpop.permute.xlu0 %666
      %668 = vrot.lane.b32.xlu0 %v665, 110
      %v669 = vpop.permute.xlu0 %668
      %670 = vrot.lane.b32.xlu0 %v660, 110
      %v671 = vpop.permute.xlu0 %670
      %vm672 = vcmask 900096
      %v673 = vsel %vm672, %v667, %v669
      %v674 = vsel %vm672, %v669, %v671
      %v676 = vsel %vm188, %v662, 0
      %v678 = vsel %vm192, %v673, 0
      %v680 = vsel %vm192, %v674, 0
      %v682 = vsel %vm192, %v671, 0
      %684 = vmatprep.subr.mxu0 %v680
      %685 = vmatpush1.msra.mxu0 %v678
      %686 = vmatprep.subr.mxu0 0.0
      %687 = vmatpush1.msra.mxu0 0.0
      %688 = vmatprep.subr.mxu0 0.0
      %689 = vmatpush1.msra.mxu0 0.0
      %690 = vmatprep.subr.mxu0 0.0
      %691 = vmatpush1.msra.mxu0 0.0
      %692 = vmatprep.subr.mxu0 0.0
      %693 = vmatpush1.msra.mxu0 0.0
      %694 = vmatprep.subr.mxu0 0.0
      %695 = vmatpush1.msra.mxu0 0.0
      %696 = vmatprep.subr.mxu0 0.0
      %697 = vmatpush1.msra.mxu0 0.0
      %698 = vmatprep.subr.mxu0 0.0
      %699 = vmatpush1.msra.mxu0 0.0
      %700 = vmatprep.subr.mxu0 0.0
      %701 = vmatpush1.msra.mxu0 0.0
      %702 = vmatprep.subr.mxu0 0.0
      %703 = vmatpush1.msra.mxu0 0.0
      %704 = vmatprep.subr.mxu0 0.0
      %705 = vmatpush1.msra.mxu0 0.0
      %706 = vmatprep.subr.mxu0 0.0
      %707 = vmatpush1.msra.mxu0 0.0
      %708 = vmatprep.subr.mxu0 0.0
      %709 = vmatpush1.msra.mxu0 0.0
      %710 = vmatprep.subr.mxu0 0.0
      %711 = vmatpush1.msra.mxu0 0.0
      %712 = vmatprep.subr.mxu0 0.0
      %713 = vmatpush1.msra.mxu0 0.0
      %714 = vmatprep.subr.mxu0 0.0
      %715 = vmatpush1.msra.mxu0 0.0
      %716 = vmatprep.subr.mxu0 0.0
      %717 = vmatpush1.msra.mxu0 0.0
      %718 = vmatprep.subr.mxu0 0.0
      %719 = vmatpush1.msra.mxu0 0.0
      %720 = vmatprep.subr.mxu0 0.0
      %721 = vmatpush1.msra.mxu0 0.0
      %722 = vmatprep.subr.mxu0 0.0
      %723 = vmatpush1.msra.mxu0 0.0
      %724 = vmatprep.subr.mxu0 0.0
      %725 = vmatpush1.msra.mxu0 0.0
      %726 = vmatprep.subr.mxu0 0.0
      %727 = vmatpush1.msra.mxu0 0.0
      %728 = vmatprep.subr.mxu0 0.0
      %729 = vmatpush1.msra.mxu0 0.0
      %730 = vmatprep.subr.mxu0 0.0
      %731 = vmatpush1.msra.mxu0 0.0
      %732 = vmatprep.subr.mxu0 0.0
      %733 = vmatpush1.msra.mxu0 0.0
      %734 = vmatprep.subr.mxu0 0.0
      %735 = vmatpush1.msra.mxu0 0.0
      %736 = vmatprep.subr.mxu0 0.0
      %737 = vmatpush1.msra.mxu0 0.0
      %738 = vmatprep.subr.mxu0 0.0
      %739 = vmatpush1.msra.mxu0 0.0
      %740 = vmatprep.subr.mxu0 0.0
      %741 = vmatpush1.msra.mxu0 0.0
      %742 = vmatprep.subr.mxu0 0.0
      %743 = vmatpush1.msra.mxu0 0.0
      %744 = vmatprep.subr.mxu0 0.0
      %745 = vmatpush1.msra.mxu0 0.0
      %746 = vmatprep.subr.mxu0 0.0
      %747 = vmatpush1.msra.mxu0 0.0
      %748 = vmatprep.mubr.f32.mxu0 0.0
      %749 = vmatmul.mubr.f32.gmra.mrb[0].mxu0 %v676
      %v750 = vpop.f32.mrb[0].mxu0
      %v751 = vadd.f32 0.0, %v750
      %v752 = vpop.f32.mrb[0].mxu0
      %v753 = vadd.f32 0.0, %v752
      %754 = vdwg.mxu0
      %755 = vmatprep.subr.mxu0 0.0
      %756 = vmatpush1.msra.mxu0 %v682
      %757 = vmatprep.subr.mxu0 0.0
      %758 = vmatpush1.msra.mxu0 0.0
      %759 = vmatprep.subr.mxu0 0.0
      %760 = vmatpush1.msra.mxu0 0.0
      %761 = vmatprep.subr.mxu0 0.0
      %762 = vmatpush1.msra.mxu0 0.0
      %763 = vmatprep.subr.mxu0 0.0
      %764 = vmatpush1.msra.mxu0 0.0
      %765 = vmatprep.subr.mxu0 0.0
      %766 = vmatpush1.msra.mxu0 0.0
      %767 = vmatprep.subr.mxu0 0.0
      %768 = vmatpush1.msra.mxu0 0.0
      %769 = vmatprep.subr.mxu0 0.0
      %770 = vmatpush1.msra.mxu0 0.0
      %771 = vmatprep.subr.mxu0 0.0
      %772 = vmatpush1.msra.mxu0 0.0
      %773 = vmatprep.subr.mxu0 0.0
      %774 = vmatpush1.msra.mxu0 0.0
      %775 = vmatprep.subr.mxu0 0.0
      %776 = vmatpush1.msra.mxu0 0.0
      %777 = vmatprep.subr.mxu0 0.0
      %778 = vmatpush1.msra.mxu0 0.0
      %779 = vmatprep.subr.mxu0 0.0
      %780 = vmatpush1.msra.mxu0 0.0
      %781 = vmatprep.subr.mxu0 0.0
      %782 = vmatpush1.msra.mxu0 0.0
      %783 = vmatprep.subr.mxu0 0.0
      %784 = vmatpush1.msra.mxu0 0.0
      %785 = vmatprep.subr.mxu0 0.0
      %786 = vmatpush1.msra.mxu0 0.0
      %787 = vmatprep.subr.mxu0 0.0
      %788 = vmatpush1.msra.mxu0 0.0
      %789 = vmatprep.subr.mxu0 0.0
      %790 = vmatpush1.msra.mxu0 0.0
      %791 = vmatprep.subr.mxu0 0.0
      %792 = vmatpush1.msra.mxu0 0.0
      %793 = vmatprep.subr.mxu0 0.0
      %794 = vmatpush1.msra.mxu0 0.0
      %795 = vmatprep.subr.mxu0 0.0
      %796 = vmatpush1.msra.mxu0 0.0
      %797 = vmatprep.subr.mxu0 0.0
      %798 = vmatpush1.msra.mxu0 0.0
      %799 = vmatprep.subr.mxu0 0.0
      %800 = vmatpush1.msra.mxu0 0.0
      %801 = vmatprep.subr.mxu0 0.0
      %802 = vmatpush1.msra.mxu0 0.0
      %803 = vmatprep.subr.mxu0 0.0
      %804 = vmatpush1.msra.mxu0 0.0
      %805 = vmatprep.subr.mxu0 0.0
      %806 = vmatpush1.msra.mxu0 0.0
      %807 = vmatprep.subr.mxu0 0.0
      %808 = vmatpush1.msra.mxu0 0.0
      %809 = vmatprep.subr.mxu0 0.0
      %810 = vmatpush1.msra.mxu0 0.0
      %811 = vmatprep.subr.mxu0 0.0
      %812 = vmatpush1.msra.mxu0 0.0
      %813 = vmatprep.subr.mxu0 0.0
      %814 = vmatpush1.msra.mxu0 0.0
      %815 = vmatprep.subr.mxu0 0.0
      %816 = vmatpush1.msra.mxu0 0.0
      %817 = vmatprep.subr.mxu0 0.0
      %818 = vmatpush1.msra.mxu0 0.0
      %819 = vmatprep.mubr.f32.mxu0 0.0
      %820 = vmatmul.mubr.f32.gmra.mrb[0].mxu0 %v676
      %v821 = vpop.f32.mrb[0].mxu0
      %v822 = vadd.f32 0.0, %v821
      %v823 = vpop.f32.mrb[0].mxu0
      %824 = vdwg.mxu0
      %v825 = vadd.f32 %v656, %v751
      %v826 = vadd.f32 %v657, %v753
      %v827 = vadd.f32 %v658, %v822
      %v828 = vld [vmem:[%s165] sm:$0xff]
      %v829 = vld [vmem:[%s165 + $0x8] sm:$0xf]
      %s830 = scalar_lea.vmem %s1, 32
      %v831 = vld [vmem:[%s830] sm:$0xff]
      %v834 = vcombine.high %v828, %v828
      %835 = vrot.lane.b32.xlu0 %v828, 109
      %v836 = vpop.permute.xlu0 %835
      %837 = vrot.lane.b32.xlu0 %v834, 109
      %v838 = vpop.permute.xlu0 %837
      %839 = vrot.lane.b32.xlu0 %v829, 109
      %v840 = vpop.permute.xlu0 %839
      %vm841 = vcmask 891904
      %v842 = vsel %vm841, %v836, %v838
      %v843 = vsel %vm841, %v838, %v840
      %v845 = vsel %vm188, %v831, 0
      %v847 = vsel %vm192, %v842, 0
      %v849 = vsel %vm192, %v843, 0
      %v851 = vsel %vm192, %v840, 0
      %853 = vmatprep.subr.mxu0 %v849
      %854 = vmatpush1.msra.mxu0 %v847
      %855 = vmatprep.subr.mxu0 0.0
      %856 = vmatpush1.msra.mxu0 0.0
      %857 = vmatprep.subr.mxu0 0.0
      %858 = vmatpush1.msra.mxu0 0.0
      %859 = vmatprep.subr.mxu0 0.0
      %860 = vmatpush1.msra.mxu0 0.0
      %861 = vmatprep.subr.mxu0 0.0
      %862 = vmatpush1.msra.mxu0 0.0
      %863 = vmatprep.subr.mxu0 0.0
      %864 = vmatpush1.msra.mxu0 0.0
      %865 = vmatprep.subr.mxu0 0.0
      %866 = vmatpush1.msra.mxu0 0.0
      %867 = vmatprep.subr.mxu0 0.0
      %868 = vmatpush1.msra.mxu0 0.0
      %869 = vmatprep.subr.mxu0 0.0
      %870 = vmatpush1.msra.mxu0 0.0
      %871 = vmatprep.subr.mxu0 0.0
      %872 = vmatpush1.msra.mxu0 0.0
      %873 = vmatprep.subr.mxu0 0.0
      %874 = vmatpush1.msra.mxu0 0.0
      %875 = vmatprep.subr.mxu0 0.0
      %876 = vmatpush1.msra.mxu0 0.0
      %877 = vmatprep.subr.mxu0 0.0
      %878 = vmatpush1.msra.mxu0 0.0
      %879 = vmatprep.subr.mxu0 0.0
      %880 = vmatpush1.msra.mxu0 0.0
      %881 = vmatprep.subr.mxu0 0.0
      %882 = vmatpush1.msra.mxu0 0.0
      %883 = vmatprep.subr.mxu0 0.0
      %884 = vmatpush1.msra.mxu0 0.0
      %885 = vmatprep.subr.mxu0 0.0
      %886 = vmatpush1.msra.mxu0 0.0
      %887 = vmatprep.subr.mxu0 0.0
      %888 = vmatpush1.msra.mxu0 0.0
      %889 = vmatprep.subr.mxu0 0.0
      %890 = vmatpush1.msra.mxu0 0.0
      %891 = vmatprep.subr.mxu0 0.0
      %892 = vmatpush1.msra.mxu0 0.0
      %893 = vmatprep.subr.mxu0 0.0
      %894 = vmatpush1.msra.mxu0 0.0
      %895 = vmatprep.subr.mxu0 0.0
      %896 = vmatpush1.msra.mxu0 0.0
      %897 = vmatprep.subr.mxu0 0.0
      %898 = vmatpush1.msra.mxu0 0.0
      %899 = vmatprep.subr.mxu0 0.0
      %900 = vmatpush1.msra.mxu0 0.0
      %901 = vmatprep.subr.mxu0 0.0
      %902 = vmatpush1.msra.mxu0 0.0
      %903 = vmatprep.subr.mxu0 0.0
      %904 = vmatpush1.msra.mxu0 0.0
      %905 = vmatprep.subr.mxu0 0.0
      %906 = vmatpush1.msra.mxu0 0.0
      %907 = vmatprep.subr.mxu0 0.0
      %908 = vmatpush1.msra.mxu0 0.0
      %909 = vmatprep.subr.mxu0 0.0
      %910 = vmatpush1.msra.mxu0 0.0
      %911 = vmatprep.subr.mxu0 0.0
      %912 = vmatpush1.msra.mxu0 0.0
      %913 = vmatprep.subr.mxu0 0.0
      %914 = vmatpush1.msra.mxu0 0.0
      %915 = vmatprep.subr.mxu0 0.0
      %916 = vmatpush1.msra.mxu0 0.0
      %917 = vmatprep.mubr.f32.mxu0 0.0
      %918 = vmatmul.mubr.f32.gmra.mrb[0].mxu0 %v845
      %v919 = vpop.f32.mrb[0].mxu0
      %v920 = vadd.f32 0.0, %v919
      %v921 = vpop.f32.mrb[0].mxu0
      %v922 = vadd.f32 0.0, %v921
      %923 = vdwg.mxu0
      %924 = vmatprep.subr.mxu0 0.0
      %925 = vmatpush1.msra.mxu0 %v851
      %926 = vmatprep.subr.mxu0 0.0
      %927 = vmatpush1.msra.mxu0 0.0
      %928 = vmatprep.subr.mxu0 0.0
      %929 = vmatpush1.msra.mxu0 0.0
      %930 = vmatprep.subr.mxu0 0.0
      %931 = vmatpush1.msra.mxu0 0.0
      %932 = vmatprep.subr.mxu0 0.0
      %933 = vmatpush1.msra.mxu0 0.0
      %934 = vmatprep.subr.mxu0 0.0
      %935 = vmatpush1.msra.mxu0 0.0
      %936 = vmatprep.subr.mxu0 0.0
      %937 = vmatpush1.msra.mxu0 0.0
      %938 = vmatprep.subr.mxu0 0.0
      %939 = vmatpush1.msra.mxu0 0.0
      %940 = vmatprep.subr.mxu0 0.0
      %941 = vmatpush1.msra.mxu0 0.0
      %942 = vmatprep.subr.mxu0 0.0
      %943 = vmatpush1.msra.mxu0 0.0
      %944 = vmatprep.subr.mxu0 0.0
      %945 = vmatpush1.msra.mxu0 0.0
      %946 = vmatprep.subr.mxu0 0.0
      %947 = vmatpush1.msra.mxu0 0.0
      %948 = vmatprep.subr.mxu0 0.0
      %949 = vmatpush1.msra.mxu0 0.0
      %950 = vmatprep.subr.mxu0 0.0
      %951 = vmatpush1.msra.mxu0 0.0
      %952 = vmatprep.subr.mxu0 0.0
      %953 = vmatpush1.msra.mxu0 0.0
      %954 = vmatprep.subr.mxu0 0.0
      %955 = vmatpush1.msra.mxu0 0.0
      %956 = vmatprep.subr.mxu0 0.0
      %957 = vmatpush1.msra.mxu0 0.0
      %958 = vmatprep.subr.mxu0 0.0
      %959 = vmatpush1.msra.mxu0 0.0
      %960 = vmatprep.subr.mxu0 0.0
      %961 = vmatpush1.msra.mxu0 0.0
      %962 = vmatprep.subr.mxu0 0.0
      %963 = vmatpush1.msra.mxu0 0.0
      %964 = vmatprep.subr.mxu0 0.0
      %965 = vmatpush1.msra.mxu0 0.0
      %966 = vmatprep.subr.mxu0 0.0
      %967 = vmatpush1.msra.mxu0 0.0
      %968 = vmatprep.subr.mxu0 0.0
      %969 = vmatpush1.msra.mxu0 0.0
      %970 = vmatprep.subr.mxu0 0.0
      %971 = vmatpush1.msra.mxu0 0.0
      %972 = vmatprep.subr.mxu0 0.0
      %973 = vmatpush1.msra.mxu0 0.0
      %974 = vmatprep.subr.mxu0 0.0
      %975 = vmatpush1.msra.mxu0 0.0
      %976 = vmatprep.subr.mxu0 0.0
      %977 = vmatpush1.msra.mxu0 0.0
      %978 = vmatprep.subr.mxu0 0.0
      %979 = vmatpush1.msra.mxu0 0.0
      %980 = vmatprep.subr.mxu0 0.0
      %981 = vmatpush1.msra.mxu0 0.0
      %982 = vmatprep.subr.mxu0 0.0
      %983 = vmatpush1.msra.mxu0 0.0
      %984 = vmatprep.subr.mxu0 0.0
      %985 = vmatpush1.msra.mxu0 0.0
      %986 = vmatprep.subr.mxu0 0.0
      %987 = vmatpush1.msra.mxu0 0.0
      %988 = vmatprep.mubr.f32.mxu0 0.0
      %989 = vmatmul.mubr.f32.gmra.mrb[0].mxu0 %v845
      %v990 = vpop.f32.mrb[0].mxu0
      %v991 = vadd.f32 0.0, %v990
      %v992 = vpop.f32.mrb[0].mxu0
      %993 = vdwg.mxu0
      %v994 = vadd.f32 %v825, %v920
      %v995 = vadd.f32 %v826, %v922
      %v996 = vadd.f32 %v827, %v991
      %v997 = vld [vmem:[%s165] sm:$0xff]
      %v998 = vld [vmem:[%s165 + $0x8] sm:$0xf]
      %s999 = scalar_lea.vmem %s1, 40
      %v1000 = vld [vmem:[%s999] sm:$0xff]
      %v1003 = vcombine.high %v997, %v997
      %1004 = vrot.lane.b32.xlu0 %v997, 108
      %v1005 = vpop.permute.xlu0 %1004
      %1006 = vrot.lane.b32.xlu0 %v1003, 108
      %v1007 = vpop.permute.xlu0 %1006
      %1008 = vrot.lane.b32.xlu0 %v998, 108
      %v1009 = vpop.permute.xlu0 %1008
      %vm1010 = vcmask 883712
      %v1011 = vsel %vm1010, %v1005, %v1007
      %v1012 = vsel %vm1010, %v1007, %v1009
      %v1014 = vsel %vm188, %v1000, 0
      %v1016 = vsel %vm192, %v1011, 0
      %v1018 = vsel %vm192, %v1012, 0
      %v1020 = vsel %vm192, %v1009, 0
      %1022 = vmatprep.subr.mxu0 %v1018
      %1023 = vmatpush1.msra.mxu0 %v1016
      %1024 = vmatprep.subr.mxu0 0.0
      %1025 = vmatpush1.msra.mxu0 0.0
      %1026 = vmatprep.subr.mxu0 0.0
      %1027 = vmatpush1.msra.mxu0 0.0
      %1028 = vmatprep.subr.mxu0 0.0
      %1029 = vmatpush1.msra.mxu0 0.0
      %1030 = vmatprep.subr.mxu0 0.0
      %1031 = vmatpush1.msra.mxu0 0.0
      %1032 = vmatprep.subr.mxu0 0.0
      %1033 = vmatpush1.msra.mxu0 0.0
      %1034 = vmatprep.subr.mxu0 0.0
      %1035 = vmatpush1.msra.mxu0 0.0
      %1036 = vmatprep.subr.mxu0 0.0
      %1037 = vmatpush1.msra.mxu0 0.0
      %1038 = vmatprep.subr.mxu0 0.0
      %1039 = vmatpush1.msra.mxu0 0.0
      %1040 = vmatprep.subr.mxu0 0.0
      %1041 = vmatpush1.msra.mxu0 0.0
      %1042 = vmatprep.subr.mxu0 0.0
      %1043 = vmatpush1.msra.mxu0 0.0
      %1044 = vmatprep.subr.mxu0 0.0
      %1045 = vmatpush1.msra.mxu0 0.0
      %1046 = vmatprep.subr.mxu0 0.0
      %1047 = vmatpush1.msra.mxu0 0.0
      %1048 = vmatprep.subr.mxu0 0.0
      %1049 = vmatpush1.msra.mxu0 0.0
      %1050 = vmatprep.subr.mxu0 0.0
      %1051 = vmatpush1.msra.mxu0 0.0
      %1052 = vmatprep.subr.mxu0 0.0
      %1053 = vmatpush1.msra.mxu0 0.0
      %1054 = vmatprep.subr.mxu0 0.0
      %1055 = vmatpush1.msra.mxu0 0.0
      %1056 = vmatprep.subr.mxu0 0.0
      %1057 = vmatpush1.msra.mxu0 0.0
      %1058 = vmatprep.subr.mxu0 0.0
      %1059 = vmatpush1.msra.mxu0 0.0
      %1060 = vmatprep.subr.mxu0 0.0
      %1061 = vmatpush1.msra.mxu0 0.0
      %1062 = vmatprep.subr.mxu0 0.0
      %1063 = vmatpush1.msra.mxu0 0.0
      %1064 = vmatprep.subr.mxu0 0.0
      %1065 = vmatpush1.msra.mxu0 0.0
      %1066 = vmatprep.subr.mxu0 0.0
      %1067 = vmatpush1.msra.mxu0 0.0
      %1068 = vmatprep.subr.mxu0 0.0
      %1069 = vmatpush1.msra.mxu0 0.0
      %1070 = vmatprep.subr.mxu0 0.0
      %1071 = vmatpush1.msra.mxu0 0.0
      %1072 = vmatprep.subr.mxu0 0.0
      %1073 = vmatpush1.msra.mxu0 0.0
      %1074 = vmatprep.subr.mxu0 0.0
      %1075 = vmatpush1.msra.mxu0 0.0
      %1076 = vmatprep.subr.mxu0 0.0
      %1077 = vmatpush1.msra.mxu0 0.0
      %1078 = vmatprep.subr.mxu0 0.0
      %1079 = vmatpush1.msra.mxu0 0.0
      %1080 = vmatprep.subr.mxu0 0.0
      %1081 = vmatpush1.msra.mxu0 0.0
      %1082 = vmatprep.subr.mxu0 0.0
      %1083 = vmatpush1.msra.mxu0 0.0
      %1084 = vmatprep.subr.mxu0 0.0
      %1085 = vmatpush1.msra.mxu0 0.0
      %1086 = vmatprep.mubr.f32.mxu0 0.0
      %1087 = vmatmul.mubr.f32.gmra.mrb[0].mxu0 %v1014
      %v1088 = vpop.f32.mrb[0].mxu0
      %v1089 = vadd.f32 0.0, %v1088
      %v1090 = vpop.f32.mrb[0].mxu0
      %v1091 = vadd.f32 0.0, %v1090
      %1092 = vdwg.mxu0
      %1093 = vmatprep.subr.mxu0 0.0
      %1094 = vmatpush1.msra.mxu0 %v1020
      %1095 = vmatprep.subr.mxu0 0.0
      %1096 = vmatpush1.msra.mxu0 0.0
      %1097 = vmatprep.subr.mxu0 0.0
      %1098 = vmatpush1.msra.mxu0 0.0
      %1099 = vmatprep.subr.mxu0 0.0
      %1100 = vmatpush1.msra.mxu0 0.0
      %1101 = vmatprep.subr.mxu0 0.0
      %1102 = vmatpush1.msra.mxu0 0.0
      %1103 = vmatprep.subr.mxu0 0.0
      %1104 = vmatpush1.msra.mxu0 0.0
      %1105 = vmatprep.subr.mxu0 0.0
      %1106 = vmatpush1.msra.mxu0 0.0
      %1107 = vmatprep.subr.mxu0 0.0
      %1108 = vmatpush1.msra.mxu0 0.0
      %1109 = vmatprep.subr.mxu0 0.0
      %1110 = vmatpush1.msra.mxu0 0.0
      %1111 = vmatprep.subr.mxu0 0.0
      %1112 = vmatpush1.msra.mxu0 0.0
      %1113 = vmatprep.subr.mxu0 0.0
      %1114 = vmatpush1.msra.mxu0 0.0
      %1115 = vmatprep.subr.mxu0 0.0
      %1116 = vmatpush1.msra.mxu0 0.0
      %1117 = vmatprep.subr.mxu0 0.0
      %1118 = vmatpush1.msra.mxu0 0.0
      %1119 = vmatprep.subr.mxu0 0.0
      %1120 = vmatpush1.msra.mxu0 0.0
      %1121 = vmatprep.subr.mxu0 0.0
      %1122 = vmatpush1.msra.mxu0 0.0
      %1123 = vmatprep.subr.mxu0 0.0
      %1124 = vmatpush1.msra.mxu0 0.0
      %1125 = vmatprep.subr.mxu0 0.0
      %1126 = vmatpush1.msra.mxu0 0.0
      %1127 = vmatprep.subr.mxu0 0.0
      %1128 = vmatpush1.msra.mxu0 0.0
      %1129 = vmatprep.subr.mxu0 0.0
      %1130 = vmatpush1.msra.mxu0 0.0
      %1131 = vmatprep.subr.mxu0 0.0
      %1132 = vmatpush1.msra.mxu0 0.0
      %1133 = vmatprep.subr.mxu0 0.0
      %1134 = vmatpush1.msra.mxu0 0.0
      %1135 = vmatprep.subr.mxu0 0.0
      %1136 = vmatpush1.msra.mxu0 0.0
      %1137 = vmatprep.subr.mxu0 0.0
      %1138 = vmatpush1.msra.mxu0 0.0
      %1139 = vmatprep.subr.mxu0 0.0
      %1140 = vmatpush1.msra.mxu0 0.0
      %1141 = vmatprep.subr.mxu0 0.0
      %1142 = vmatpush1.msra.mxu0 0.0
      %1143 = vmatprep.subr.mxu0 0.0
      %1144 = vmatpush1.msra.mxu0 0.0
      %1145 = vmatprep.subr.mxu0 0.0
      %1146 = vmatpush1.msra.mxu0 0.0
      %1147 = vmatprep.subr.mxu0 0.0
      %1148 = vmatpush1.msra.mxu0 0.0
      %1149 = vmatprep.subr.mxu0 0.0
      %1150 = vmatpush1.msra.mxu0 0.0
      %1151 = vmatprep.subr.mxu0 0.0
      %1152 = vmatpush1.msra.mxu0 0.0
      %1153 = vmatprep.subr.mxu0 0.0
      %1154 = vmatpush1.msra.mxu0 0.0
      %1155 = vmatprep.subr.mxu0 0.0
      %1156 = vmatpush1.msra.mxu0 0.0
      %1157 = vmatprep.mubr.f32.mxu0 0.0
      %1158 = vmatmul.mubr.f32.gmra.mrb[0].mxu0 %v1014
      %v1159 = vpop.f32.mrb[0].mxu0
      %v1160 = vadd.f32 0.0, %v1159
      %v1161 = vpop.f32.mrb[0].mxu0
      %1162 = vdwg.mxu0
      %v1163 = vadd.f32 %v994, %v1089
      %v1164 = vadd.f32 %v995, %v1091
      %v1165 = vadd.f32 %v996, %v1160
      %v1166 = vld [vmem:[%s165] sm:$0xff]
      %v1167 = vld [vmem:[%s165 + $0x8] sm:$0xf]
      %s1168 = scalar_lea.vmem %s1, 48
      %v1169 = vld [vmem:[%s1168] sm:$0xff]
      %v1172 = vcombine.high %v1166, %v1166
      %1173 = vrot.lane.b32.xlu0 %v1166, 92
      %v1174 = vpop.permute.xlu0 %1173
      %1175 = vrot.lane.b32.xlu0 %v1172, 92
      %v1176 = vpop.permute.xlu0 %1175
      %1177 = vrot.lane.b32.xlu0 %v1167, 92
      %v1178 = vpop.permute.xlu0 %1177
      %vm1179 = vcmask 752640
      %v1180 = vsel %vm1179, %v1174, %v1176
      %v1181 = vsel %vm1179, %v1176, %v1178
      %v1183 = vsel %vm188, %v1169, 0
      %v1185 = vsel %vm192, %v1180, 0
      %v1187 = vsel %vm192, %v1181, 0
      %v1189 = vsel %vm192, %v1178, 0
      %1191 = vmatprep.subr.mxu0 %v1187
      %1192 = vmatpush1.msra.mxu0 %v1185
      %1193 = vmatprep.subr.mxu0 0.0
      %1194 = vmatpush1.msra.mxu0 0.0
      %1195 = vmatprep.subr.mxu0 0.0
      %1196 = vmatpush1.msra.mxu0 0.0
      %1197 = vmatprep.subr.mxu0 0.0
      %1198 = vmatpush1.msra.mxu0 0.0
      %1199 = vmatprep.subr.mxu0 0.0
      %1200 = vmatpush1.msra.mxu0 0.0
      %1201 = vmatprep.subr.mxu0 0.0
      %1202 = vmatpush1.msra.mxu0 0.0
      %1203 = vmatprep.subr.mxu0 0.0
      %1204 = vmatpush1.msra.mxu0 0.0
      %1205 = vmatprep.subr.mxu0 0.0
      %1206 = vmatpush1.msra.mxu0 0.0
      %1207 = vmatprep.subr.mxu0 0.0
      %1208 = vmatpush1.msra.mxu0 0.0
      %1209 = vmatprep.subr.mxu0 0.0
      %1210 = vmatpush1.msra.mxu0 0.0
      %1211 = vmatprep.subr.mxu0 0.0
      %1212 = vmatpush1.msra.mxu0 0.0
      %1213 = vmatprep.subr.mxu0 0.0
      %1214 = vmatpush1.msra.mxu0 0.0
      %1215 = vmatprep.subr.mxu0 0.0
      %1216 = vmatpush1.msra.mxu0 0.0
      %1217 = vmatprep.subr.mxu0 0.0
      %1218 = vmatpush1.msra.mxu0 0.0
      %1219 = vmatprep.subr.mxu0 0.0
      %1220 = vmatpush1.msra.mxu0 0.0
      %1221 = vmatprep.subr.mxu0 0.0
      %1222 = vmatpush1.msra.mxu0 0.0
      %1223 = vmatprep.subr.mxu0 0.0
      %1224 = vmatpush1.msra.mxu0 0.0
      %1225 = vmatprep.subr.mxu0 0.0
      %1226 = vmatpush1.msra.mxu0 0.0
      %1227 = vmatprep.subr.mxu0 0.0
      %1228 = vmatpush1.msra.mxu0 0.0
      %1229 = vmatprep.subr.mxu0 0.0
      %1230 = vmatpush1.msra.mxu0 0.0
      %1231 = vmatprep.subr.mxu0 0.0
      %1232 = vmatpush1.msra.mxu0 0.0
      %1233 = vmatprep.subr.mxu0 0.0
      %1234 = vmatpush1.msra.mxu0 0.0
      %1235 = vmatprep.subr.mxu0 0.0
      %1236 = vmatpush1.msra.mxu0 0.0
      %1237 = vmatprep.subr.mxu0 0.0
      %1238 = vmatpush1.msra.mxu0 0.0
      %1239 = vmatprep.subr.mxu0 0.0
      %1240 = vmatpush1.msra.mxu0 0.0
      %1241 = vmatprep.subr.mxu0 0.0
      %1242 = vmatpush1.msra.mxu0 0.0
      %1243 = vmatprep.subr.mxu0 0.0
      %1244 = vmatpush1.msra.mxu0 0.0
      %1245 = vmatprep.subr.mxu0 0.0
      %1246 = vmatpush1.msra.mxu0 0.0
      %1247 = vmatprep.subr.mxu0 0.0
      %1248 = vmatpush1.msra.mxu0 0.0
      %1249 = vmatprep.subr.mxu0 0.0
      %1250 = vmatpush1.msra.mxu0 0.0
      %1251 = vmatprep.subr.mxu0 0.0
      %1252 = vmatpush1.msra.mxu0 0.0
      %1253 = vmatprep.subr.mxu0 0.0
      %1254 = vmatpush1.msra.mxu0 0.0
      %1255 = vmatprep.mubr.f32.mxu0 0.0
      %1256 = vmatmul.mubr.f32.gmra.mrb[0].mxu0 %v1183
      %v1257 = vpop.f32.mrb[0].mxu0
      %v1258 = vadd.f32 0.0, %v1257
      %v1259 = vpop.f32.mrb[0].mxu0
      %v1260 = vadd.f32 0.0, %v1259
      %1261 = vdwg.mxu0
      %1262 = vmatprep.subr.mxu0 0.0
      %1263 = vmatpush1.msra.mxu0 %v1189
      %1264 = vmatprep.subr.mxu0 0.0
      %1265 = vmatpush1.msra.mxu0 0.0
      %1266 = vmatprep.subr.mxu0 0.0
      %1267 = vmatpush1.msra.mxu0 0.0
      %1268 = vmatprep.subr.mxu0 0.0
      %1269 = vmatpush1.msra.mxu0 0.0
      %1270 = vmatprep.subr.mxu0 0.0
      %1271 = vmatpush1.msra.mxu0 0.0
      %1272 = vmatprep.subr.mxu0 0.0
      %1273 = vmatpush1.msra.mxu0 0.0
      %1274 = vmatprep.subr.mxu0 0.0
      %1275 = vmatpush1.msra.mxu0 0.0
      %1276 = vmatprep.subr.mxu0 0.0
      %1277 = vmatpush1.msra.mxu0 0.0
      %1278 = vmatprep.subr.mxu0 0.0
      %1279 = vmatpush1.msra.mxu0 0.0
      %1280 = vmatprep.subr.mxu0 0.0
      %1281 = vmatpush1.msra.mxu0 0.0
      %1282 = vmatprep.subr.mxu0 0.0
      %1283 = vmatpush1.msra.mxu0 0.0
      %1284 = vmatprep.subr.mxu0 0.0
      %1285 = vmatpush1.msra.mxu0 0.0
      %1286 = vmatprep.subr.mxu0 0.0
      %1287 = vmatpush1.msra.mxu0 0.0
      %1288 = vmatprep.subr.mxu0 0.0
      %1289 = vmatpush1.msra.mxu0 0.0
      %1290 = vmatprep.subr.mxu0 0.0
      %1291 = vmatpush1.msra.mxu0 0.0
      %1292 = vmatprep.subr.mxu0 0.0
      %1293 = vmatpush1.msra.mxu0 0.0
      %1294 = vmatprep.subr.mxu0 0.0
      %1295 = vmatpush1.msra.mxu0 0.0
      %1296 = vmatprep.subr.mxu0 0.0
      %1297 = vmatpush1.msra.mxu0 0.0
      %1298 = vmatprep.subr.mxu0 0.0
      %1299 = vmatpush1.msra.mxu0 0.0
      %1300 = vmatprep.subr.mxu0 0.0
      %1301 = vmatpush1.msra.mxu0 0.0
      %1302 = vmatprep.subr.mxu0 0.0
      %1303 = vmatpush1.msra.mxu0 0.0
      %1304 = vmatprep.subr.mxu0 0.0
      %1305 = vmatpush1.msra.mxu0 0.0
      %1306 = vmatprep.subr.mxu0 0.0
      %1307 = vmatpush1.msra.mxu0 0.0
      %1308 = vmatprep.subr.mxu0 0.0
      %1309 = vmatpush1.msra.mxu0 0.0
      %1310 = vmatprep.subr.mxu0 0.0
      %1311 = vmatpush1.msra.mxu0 0.0
      %1312 = vmatprep.subr.mxu0 0.0
      %1313 = vmatpush1.msra.mxu0 0.0
      %1314 = vmatprep.subr.mxu0 0.0
      %1315 = vmatpush1.msra.mxu0 0.0
      %1316 = vmatprep.subr.mxu0 0.0
      %1317 = vmatpush1.msra.mxu0 0.0
      %1318 = vmatprep.subr.mxu0 0.0
      %1319 = vmatpush1.msra.mxu0 0.0
      %1320 = vmatprep.subr.mxu0 0.0
      %1321 = vmatpush1.msra.mxu0 0.0
      %1322 = vmatprep.subr.mxu0 0.0
      %1323 = vmatpush1.msra.mxu0 0.0
      %1324 = vmatprep.subr.mxu0 0.0
      %1325 = vmatpush1.msra.mxu0 0.0
      %1326 = vmatprep.mubr.f32.mxu0 0.0
      %1327 = vmatmul.mubr.f32.gmra.mrb[0].mxu0 %v1183
      %v1328 = vpop.f32.mrb[0].mxu0
      %v1329 = vadd.f32 0.0, %v1328
      %v1330 = vpop.f32.mrb[0].mxu0
      %1331 = vdwg.mxu0
      %v1332 = vadd.f32 %v1163, %v1258
      %v1333 = vadd.f32 %v1164, %v1260
      %v1334 = vadd.f32 %v1165, %v1329
      %v1335 = vld [vmem:[%s165] sm:$0xff]
      %v1336 = vld [vmem:[%s165 + $0x8] sm:$0xf]
      %s1337 = scalar_lea.vmem %s1, 56
      %v1338 = vld [vmem:[%s1337] sm:$0xff]
      %v1341 = vcombine.high %v1335, %v1335
      %1342 = vrot.lane.b32.xlu0 %v1335, 91
      %v1343 = vpop.permute.xlu0 %1342
      %1344 = vrot.lane.b32.xlu0 %v1341, 91
      %v1345 = vpop.permute.xlu0 %1344
      %1346 = vrot.lane.b32.xlu0 %v1336, 91
      %v1347 = vpop.permute.xlu0 %1346
      %vm1348 = vcmask 744448
      %v1349 = vsel %vm1348, %v1343, %v1345
      %v1350 = vsel %vm1348, %v1345, %v1347
      %v1352 = vsel %vm188, %v1338, 0
      %v1354 = vsel %vm192, %v1349, 0
      %v1356 = vsel %vm192, %v1350, 0
      %v1358 = vsel %vm192, %v1347, 0
      %1360 = vmatprep.subr.mxu0 %v1356
      %1361 = vmatpush1.msra.mxu0 %v1354
      %1362 = vmatprep.subr.mxu0 0.0
      %1363 = vmatpush1.msra.mxu0 0.0
      %1364 = vmatprep.subr.mxu0 0.0
      %1365 = vmatpush1.msra.mxu0 0.0
      %1366 = vmatprep.subr.mxu0 0.0
      %1367 = vmatpush1.msra.mxu0 0.0
      %1368 = vmatprep.subr.mxu0 0.0
      %1369 = vmatpush1.msra.mxu0 0.0
      %1370 = vmatprep.subr.mxu0 0.0
      %1371 = vmatpush1.msra.mxu0 0.0
      %1372 = vmatprep.subr.mxu0 0.0
      %1373 = vmatpush1.msra.mxu0 0.0
      %1374 = vmatprep.subr.mxu0 0.0
      %1375 = vmatpush1.msra.mxu0 0.0
      %1376 = vmatprep.subr.mxu0 0.0
      %1377 = vmatpush1.msra.mxu0 0.0
      %1378 = vmatprep.subr.mxu0 0.0
      %1379 = vmatpush1.msra.mxu0 0.0
      %1380 = vmatprep.subr.mxu0 0.0
      %1381 = vmatpush1.msra.mxu0 0.0
      %1382 = vmatprep.subr.mxu0 0.0
      %1383 = vmatpush1.msra.mxu0 0.0
      %1384 = vmatprep.subr.mxu0 0.0
      %1385 = vmatpush1.msra.mxu0 0.0
      %1386 = vmatprep.subr.mxu0 0.0
      %1387 = vmatpush1.msra.mxu0 0.0
      %1388 = vmatprep.subr.mxu0 0.0
      %1389 = vmatpush1.msra.mxu0 0.0
      %1390 = vmatprep.subr.mxu0 0.0
      %1391 = vmatpush1.msra.mxu0 0.0
      %1392 = vmatprep.subr.mxu0 0.0
      %1393 = vmatpush1.msra.mxu0 0.0
      %1394 = vmatprep.subr.mxu0 0.0
      %1395 = vmatpush1.msra.mxu0 0.0
      %1396 = vmatprep.subr.mxu0 0.0
      %1397 = vmatpush1.msra.mxu0 0.0
      %1398 = vmatprep.subr.mxu0 0.0
      %1399 = vmatpush1.msra.mxu0 0.0
      %1400 = vmatprep.subr.mxu0 0.0
      %1401 = vmatpush1.msra.mxu0 0.0
      %1402 = vmatprep.subr.mxu0 0.0
      %1403 = vmatpush1.msra.mxu0 0.0
      %1404 = vmatprep.subr.mxu0 0.0
      %1405 = vmatpush1.msra.mxu0 0.0
      %1406 = vmatprep.subr.mxu0 0.0
      %1407 = vmatpush1.msra.mxu0 0.0
      %1408 = vmatprep.subr.mxu0 0.0
      %1409 = vmatpush1.msra.mxu0 0.0
      %1410 = vmatprep.subr.mxu0 0.0
      %1411 = vmatpush1.msra.mxu0 0.0
      %1412 = vmatprep.subr.mxu0 0.0
      %1413 = vmatpush1.msra.mxu0 0.0
      %1414 = vmatprep.subr.mxu0 0.0
      %1415 = vmatpush1.msra.mxu0 0.0
      %1416 = vmatprep.subr.mxu0 0.0
      %1417 = vmatpush1.msra.mxu0 0.0
      %1418 = vmatprep.subr.mxu0 0.0
      %1419 = vmatpush1.msra.mxu0 0.0
      %1420 = vmatprep.subr.mxu0 0.0
      %1421 = vmatpush1.msra.mxu0 0.0
      %1422 = vmatprep.subr.mxu0 0.0
      %1423 = vmatpush1.msra.mxu0 0.0
      %1424 = vmatprep.mubr.f32.mxu0 0.0
      %1425 = vmatmul.mubr.f32.gmra.mrb[0].mxu0 %v1352
      %v1426 = vpop.f32.mrb[0].mxu0
      %v1427 = vadd.f32 0.0, %v1426
      %v1428 = vpop.f32.mrb[0].mxu0
      %v1429 = vadd.f32 0.0, %v1428
      %1430 = vdwg.mxu0
      %1431 = vmatprep.subr.mxu0 0.0
      %1432 = vmatpush1.msra.mxu0 %v1358
      %1433 = vmatprep.subr.mxu0 0.0
      %1434 = vmatpush1.msra.mxu0 0.0
      %1435 = vmatprep.subr.mxu0 0.0
      %1436 = vmatpush1.msra.mxu0 0.0
      %1437 = vmatprep.subr.mxu0 0.0
      %1438 = vmatpush1.msra.mxu0 0.0
      %1439 = vmatprep.subr.mxu0 0.0
      %1440 = vmatpush1.msra.mxu0 0.0
      %1441 = vmatprep.subr.mxu0 0.0
      %1442 = vmatpush1.msra.mxu0 0.0
      %1443 = vmatprep.subr.mxu0 0.0
      %1444 = vmatpush1.msra.mxu0 0.0
      %1445 = vmatprep.subr.mxu0 0.0
      %1446 = vmatpush1.msra.mxu0 0.0
      %1447 = vmatprep.subr.mxu0 0.0
      %1448 = vmatpush1.msra.mxu0 0.0
      %1449 = vmatprep.subr.mxu0 0.0
      %1450 = vmatpush1.msra.mxu0 0.0
      %1451 = vmatprep.subr.mxu0 0.0
      %1452 = vmatpush1.msra.mxu0 0.0
      %1453 = vmatprep.subr.mxu0 0.0
      %1454 = vmatpush1.msra.mxu0 0.0
      %1455 = vmatprep.subr.mxu0 0.0
      %1456 = vmatpush1.msra.mxu0 0.0
      %1457 = vmatprep.subr.mxu0 0.0
      %1458 = vmatpush1.msra.mxu0 0.0
      %1459 = vmatprep.subr.mxu0 0.0
      %1460 = vmatpush1.msra.mxu0 0.0
      %1461 = vmatprep.subr.mxu0 0.0
      %1462 = vmatpush1.msra.mxu0 0.0
      %1463 = vmatprep.subr.mxu0 0.0
      %1464 = vmatpush1.msra.mxu0 0.0
      %1465 = vmatprep.subr.mxu0 0.0
      %1466 = vmatpush1.msra.mxu0 0.0
      %1467 = vmatprep.subr.mxu0 0.0
      %1468 = vmatpush1.msra.mxu0 0.0
      %1469 = vmatprep.subr.mxu0 0.0
      %1470 = vmatpush1.msra.mxu0 0.0
      %1471 = vmatprep.subr.mxu0 0.0
      %1472 = vmatpush1.msra.mxu0 0.0
      %1473 = vmatprep.subr.mxu0 0.0
      %1474 = vmatpush1.msra.mxu0 0.0
      %1475 = vmatprep.subr.mxu0 0.0
      %1476 = vmatpush1.msra.mxu0 0.0
      %1477 = vmatprep.subr.mxu0 0.0
      %1478 = vmatpush1.msra.mxu0 0.0
      %1479 = vmatprep.subr.mxu0 0.0
      %1480 = vmatpush1.msra.mxu0 0.0
      %1481 = vmatprep.subr.mxu0 0.0
      %1482 = vmatpush1.msra.mxu0 0.0
      %1483 = vmatprep.subr.mxu0 0.0
      %1484 = vmatpush1.msra.mxu0 0.0
      %1485 = vmatprep.subr.mxu0 0.0
      %1486 = vmatpush1.msra.mxu0 0.0
      %1487 = vmatprep.subr.mxu0 0.0
      %1488 = vmatpush1.msra.mxu0 0.0
      %1489 = vmatprep.subr.mxu0 0.0
      %1490 = vmatpush1.msra.mxu0 0.0
      %1491 = vmatprep.subr.mxu0 0.0
      %1492 = vmatpush1.msra.mxu0 0.0
      %1493 = vmatprep.subr.mxu0 0.0
      %1494 = vmatpush1.msra.mxu0 0.0
      %1495 = vmatprep.mubr.f32.mxu0 0.0
      %1496 = vmatmul.mubr.f32.gmra.mrb[0].mxu0 %v1352
      %v1497 = vpop.f32.mrb[0].mxu0
      %v1498 = vadd.f32 0.0, %v1497
      %v1499 = vpop.f32.mrb[0].mxu0
      %1500 = vdwg.mxu0
      %v1501 = vadd.f32 %v1332, %v1427
      %v1502 = vadd.f32 %v1333, %v1429
      %v1503 = vadd.f32 %v1334, %v1498
      %v1504 = vld [vmem:[%s165] sm:$0xff]
      %v1505 = vld [vmem:[%s165 + $0x8] sm:$0xf]
      %s1506 = scalar_lea.vmem %s1, 64
      %v1507 = vld [vmem:[%s1506] sm:$0xff]
      %v1510 = vcombine.high %v1504, %v1504
      %1511 = vrot.lane.b32.xlu0 %v1504, 90
      %v1512 = vpop.permute.xlu0 %1511
      %1513 = vrot.lane.b32.xlu0 %v1510, 90
      %v1514 = vpop.permute.xlu0 %1513
      %1515 = vrot.lane.b32.xlu0 %v1505, 90
      %v1516 = vpop.permute.xlu0 %1515
      %vm1517 = vcmask 736256
      %v1518 = vsel %vm1517, %v1512, %v1514
      %v1519 = vsel %vm1517, %v1514, %v1516
      %v1521 = vsel %vm188, %v1507, 0
      %v1523 = vsel %vm192, %v1518, 0
      %v1525 = vsel %vm192, %v1519, 0
      %v1527 = vsel %vm192, %v1516, 0
      %1529 = vmatprep.subr.mxu0 %v1525
      %1530 = vmatpush1.msra.mxu0 %v1523
      %1531 = vmatprep.subr.mxu0 0.0
      %1532 = vmatpush1.msra.mxu0 0.0
      %1533 = vmatprep.subr.mxu0 0.0
      %1534 = vmatpush1.msra.mxu0 0.0
      %1535 = vmatprep.subr.mxu0 0.0
      %1536 = vmatpush1.msra.mxu0 0.0
      %1537 = vmatprep.subr.mxu0 0.0
      %1538 = vmatpush1.msra.mxu0 0.0
      %1539 = vmatprep.subr.mxu0 0.0
      %1540 = vmatpush1.msra.mxu0 0.0
      %1541 = vmatprep.subr.mxu0 0.0
      %1542 = vmatpush1.msra.mxu0 0.0
      %1543 = vmatprep.subr.mxu0 0.0
      %1544 = vmatpush1.msra.mxu0 0.0
      %1545 = vmatprep.subr.mxu0 0.0
      %1546 = vmatpush1.msra.mxu0 0.0
      %1547 = vmatprep.subr.mxu0 0.0
      %1548 = vmatpush1.msra.mxu0 0.0
      %1549 = vmatprep.subr.mxu0 0.0
      %1550 = vmatpush1.msra.mxu0 0.0
      %1551 = vmatprep.subr.mxu0 0.0
      %1552 = vmatpush1.msra.mxu0 0.0
      %1553 = vmatprep.subr.mxu0 0.0
      %1554 = vmatpush1.msra.mxu0 0.0
      %1555 = vmatprep.subr.mxu0 0.0
      %1556 = vmatpush1.msra.mxu0 0.0
      %1557 = vmatprep.subr.mxu0 0.0
      %1558 = vmatpush1.msra.mxu0 0.0
      %1559 = vmatprep.subr.mxu0 0.0
      %1560 = vmatpush1.msra.mxu0 0.0
      %1561 = vmatprep.subr.mxu0 0.0
      %1562 = vmatpush1.msra.mxu0 0.0
      %1563 = vmatprep.subr.mxu0 0.0
      %1564 = vmatpush1.msra.mxu0 0.0
      %1565 = vmatprep.subr.mxu0 0.0
      %1566 = vmatpush1.msra.mxu0 0.0
      %1567 = vmatprep.subr.mxu0 0.0
      %1568 = vmatpush1.msra.mxu0 0.0
      %1569 = vmatprep.subr.mxu0 0.0
      %1570 = vmatpush1.msra.mxu0 0.0
      %1571 = vmatprep.subr.mxu0 0.0
      %1572 = vmatpush1.msra.mxu0 0.0
      %1573 = vmatprep.subr.mxu0 0.0
      %1574 = vmatpush1.msra.mxu0 0.0
      %1575 = vmatprep.subr.mxu0 0.0
      %1576 = vmatpush1.msra.mxu0 0.0
      %1577 = vmatprep.subr.mxu0 0.0
      %1578 = vmatpush1.msra.mxu0 0.0
      %1579 = vmatprep.subr.mxu0 0.0
      %1580 = vmatpush1.msra.mxu0 0.0
      %1581 = vmatprep.subr.mxu0 0.0
      %1582 = vmatpush1.msra.mxu0 0.0
      %1583 = vmatprep.subr.mxu0 0.0
      %1584 = vmatpush1.msra.mxu0 0.0
      %1585 = vmatprep.subr.mxu0 0.0
      %1586 = vmatpush1.msra.mxu0 0.0
      %1587 = vmatprep.subr.mxu0 0.0
      %1588 = vmatpush1.msra.mxu0 0.0
      %1589 = vmatprep.subr.mxu0 0.0
      %1590 = vmatpush1.msra.mxu0 0.0
      %1591 = vmatprep.subr.mxu0 0.0
      %1592 = vmatpush1.msra.mxu0 0.0
      %1593 = vmatprep.mubr.f32.mxu0 0.0
      %1594 = vmatmul.mubr.f32.gmra.mrb[0].mxu0 %v1521
      %v1595 = vpop.f32.mrb[0].mxu0
      %v1596 = vadd.f32 0.0, %v1595
      %v1597 = vpop.f32.mrb[0].mxu0
      %v1598 = vadd.f32 0.0, %v1597
      %1599 = vdwg.mxu0
      %1600 = vmatprep.subr.mxu0 0.0
      %1601 = vmatpush1.msra.mxu0 %v1527
      %1602 = vmatprep.subr.mxu0 0.0
      %1603 = vmatpush1.msra.mxu0 0.0
      %1604 = vmatprep.subr.mxu0 0.0
      %1605 = vmatpush1.msra.mxu0 0.0
      %1606 = vmatprep.subr.mxu0 0.0
      %1607 = vmatpush1.msra.mxu0 0.0
      %1608 = vmatprep.subr.mxu0 0.0
      %1609 = vmatpush1.msra.mxu0 0.0
      %1610 = vmatprep.subr.mxu0 0.0
      %1611 = vmatpush1.msra.mxu0 0.0
      %1612 = vmatprep.subr.mxu0 0.0
      %1613 = vmatpush1.msra.mxu0 0.0
      %1614 = vmatprep.subr.mxu0 0.0
      %1615 = vmatpush1.msra.mxu0 0.0
      %1616 = vmatprep.subr.mxu0 0.0
      %1617 = vmatpush1.msra.mxu0 0.0
      %1618 = vmatprep.subr.mxu0 0.0
      %1619 = vmatpush1.msra.mxu0 0.0
      %1620 = vmatprep.subr.mxu0 0.0
      %1621 = vmatpush1.msra.mxu0 0.0
      %1622 = vmatprep.subr.mxu0 0.0
      %1623 = vmatpush1.msra.mxu0 0.0
      %1624 = vmatprep.subr.mxu0 0.0
      %1625 = vmatpush1.msra.mxu0 0.0
      %1626 = vmatprep.subr.mxu0 0.0
      %1627 = vmatpush1.msra.mxu0 0.0
      %1628 = vmatprep.subr.mxu0 0.0
      %1629 = vmatpush1.msra.mxu0 0.0
      %1630 = vmatprep.subr.mxu0 0.0
      %1631 = vmatpush1.msra.mxu0 0.0
      %1632 = vmatprep.subr.mxu0 0.0
      %1633 = vmatpush1.msra.mxu0 0.0
      %1634 = vmatprep.subr.mxu0 0.0
      %1635 = vmatpush1.msra.mxu0 0.0
      %1636 = vmatprep.subr.mxu0 0.0
      %1637 = vmatpush1.msra.mxu0 0.0
      %1638 = vmatprep.subr.mxu0 0.0
      %1639 = vmatpush1.msra.mxu0 0.0
      %1640 = vmatprep.subr.mxu0 0.0
      %1641 = vmatpush1.msra.mxu0 0.0
      %1642 = vmatprep.subr.mxu0 0.0
      %1643 = vmatpush1.msra.mxu0 0.0
      %1644 = vmatprep.subr.mxu0 0.0
      %1645 = vmatpush1.msra.mxu0 0.0
      %1646 = vmatprep.subr.mxu0 0.0
      %1647 = vmatpush1.msra.mxu0 0.0
      %1648 = vmatprep.subr.mxu0 0.0
      %1649 = vmatpush1.msra.mxu0 0.0
      %1650 = vmatprep.subr.mxu0 0.0
      %1651 = vmatpush1.msra.mxu0 0.0
      %1652 = vmatprep.subr.mxu0 0.0
      %1653 = vmatpush1.msra.mxu0 0.0
      %1654 = vmatprep.subr.mxu0 0.0
      %1655 = vmatpush1.msra.mxu0 0.0
      %1656 = vmatprep.subr.mxu0 0.0
      %1657 = vmatpush1.msra.mxu0 0.0
      %1658 = vmatprep.subr.mxu0 0.0
      %1659 = vmatpush1.msra.mxu0 0.0
      %1660 = vmatprep.subr.mxu0 0.0
      %1661 = vmatpush1.msra.mxu0 0.0
      %1662 = vmatprep.subr.mxu0 0.0
      %1663 = vmatpush1.msra.mxu0 0.0
      %1664 = vmatprep.mubr.f32.mxu0 0.0
      %1665 = vmatmul.mubr.f32.gmra.mrb[0].mxu0 %v1521
      %v1666 = vpop.f32.mrb[0].mxu0
      %v1667 = vadd.f32 0.0, %v1666
      %v1668 = vpop.f32.mrb[0].mxu0
      %1669 = vdwg.mxu0
      %v1670 = vadd.f32 %v1501, %v1596
      %v1671 = vadd.f32 %v1502, %v1598
      %v1672 = vadd.f32 %v1503, %v1667
      %v1673 = vld [vmem:[%s2] sm:$0x7]
      %v1675 = vlaneseq
      %v1676 = vshrl.u32 %v1675, 7
      %v1677 = vsub.s32 0, %v1676
      %v1678 = vrot.slane %v1673, %v1677
      %v1679 = vlaneseq
      %v1680 = vshrl.u32 %v1679, 7
      %v1681 = vsub.s32 1, %v1680
      %v1682 = vrot.slane %v1673, %v1681
      %v1683 = vlaneseq
      %v1684 = vshrl.u32 %v1683, 7
      %v1685 = vsub.s32 2, %v1684
      %v1686 = vrot.slane %v1673, %v1685
      %v1690 = vmul.f32 %v1670, %v1678
      %v1691 = vmul.f32 %v1671, %v1682
      %v1692 = vmul.f32 %v1672, %v1686
      %v1693 = vadd.f32 %v1690, %v1691
      %vm1694 = vcmask 556032
      %v1695 = vsel %vm1694, %v1692, 0.0
      %v1696 = vadd.f32 %v1693, %v1695
      %1697 = vadd.xlane.f32.xlu0 %v1696
      %v1698 = vpop.xlane.xlu0 %1697
      %v1699 = vmul.f32 %v1698, 0.00390625
      %v1700 = vsub.f32 %v1670, %v1699
      %v1701 = vsub.f32 %v1671, %v1699
      %v1702 = vsub.f32 %v1672, %v1699
      %v1703 = vmul.f32 %v1700, %v1678
      %v1704 = vmul.f32 %v1701, %v1682
      %v1705 = vmul.f32 %v1702, %v1686
      %v1706 = vmul.f32 %v1703, %v1703
      %v1707 = vmul.f32 %v1704, %v1704
      %v1708 = vmul.f32 %v1705, %v1705
      %v1709 = vadd.f32 %v1706, %v1707
      %v1710 = vsel %vm1694, %v1708, 0.0
      %v1711 = vadd.f32 %v1709, %v1710
      %1712 = vadd.xlane.f32.xlu0 %v1711
      %v1713 = vpop.xlane.xlu0 %1712
      %v1714 = vmul.f32 %v1713, 0.00390625
      %v1715 = vadd.f32 %v1714, 1e-05
      %v1716 = vrsqrt.pop %v1715
      %v1717 = vmul.f32 %v1700, %v1716
      %v1718 = vmul.f32 %v1701, %v1716
      %v1719 = vmul.f32 %v1702, %v1716
      %v1720 = vmax.f32 %v1717, 0.0
      %v1721 = vmax.f32 %v1718, 0.0
      %v1722 = vmax.f32 %v1719, 0.0
      %1723 = vst [vmem:[%s170] sm:$0xff] %v1720
      %1724 = vst [vmem:[%s170 + $0x8] sm:$0xff] %v1721
      %1725 = vst.msk [vmem:[%s170 + $0x10] sm:$0xff] %vm1694, %v1722
      %p1726 = scmp.lt.s32.totalorder %s14, 1
      %s1727 = scalar_select %p1726, %s14, 1
      %s1728 = smul.addr %s1727, 3
      %s1729 = smul.addr %s1728, 8
      %s1730 = scalar_lea.vmem %s3, %s1729
      // Predicated region
      $region33: #{conv_block_forward.1} parent=31 // pred_check
        %p1731 = pneg %p100
      $region34: #{conv_block_forward.1} parent=31 // pred_check_branch
        %1733 = sbr.rel (%p1731) target = $region36
      $region35: #{conv_block_forward.1} parent=31 // pred_region
        _
      $region36: #{conv_block_forward.1} parent=31 // pred_fallthru
        _
    $region32: #{conv_block_forward.1} parent=5 // pred_fallthru
      _
    %p1734 = scmp.le.s32.totalorder 2, %s9
    // Predicated region
    $region37: #{conv_block_forward.1} parent=5 // pred_check
      %p1735 = pneg %p1734
    $region38: #{conv_block_forward.1} parent=5 // pred_check_branch
      %1737 = sbr.rel (%p1735) target = $region40
    $region39: #{conv_block_forward.1} parent=5 // pred_region
      %s1738 = ssub.s32 %s9, 2
      // Predicated region
      $region41: #{conv_block_forward.1} parent=39 // pred_check
        %p1739 = pneg %p106
      $region42: #{conv_block_forward.1} parent=39 // pred_check_branch
        %1741 = sbr.rel (%p1739) target = $region44
      $region43: #{conv_block_forward.1} parent=39 // pred_region
        %p1742 = scmp.lt.s32.totalorder %s15, 1
        %s1743 = scalar_select %p1742, %s15, 1
        %s1744 = smul.addr %s1743, 3
        %s1745 = smul.addr %s1744, 8
        %s1746 = scalar_lea.vmem %s3, %s1745
      $region44: #{conv_block_forward.1} parent=39 // pred_fallthru
        _
    $region40: #{conv_block_forward.1} parent=5 // pred_fallthru
      _
  $region6: #{conv_block_forward.1} parent=0 // loop_footer
    %s13 = sadd.s32 1, %s9
  $region7: #{conv_block_forward.1} parent=0 // loop_footer_branch
    %8 = sbr.rel target = $region3
  $region8: #{conv_block_forward.1} parent=0 // loop_exit
    _

</llo_original>
